<compile_context>
chip_gen: v5e
topology: v5e:2x2
jax: 0.10.0
libtpu: 0.0.40
codegen_flags: <defaults>
</compile_context>

<pallas_src>
import jax
import jax.numpy as jnp
from jax.experimental import pallas as pl
from jax.experimental.pallas import tpu as pltpu


# ----------------------------- Pallas kernel --------------------------------

def _s4_layer_kernel(x_ref, xres_ref, gamma_ref, beta_ref, tmat_ref, wT_ref,
                     bout_ref, o_ref):
    B, H, L = x_ref.shape          # full-sequence block (LN stats + conv contraction)
    tl = o_ref.shape[-1]           # output L tile handled by this grid step

    x = x_ref[...]                                            # (B, H, L) f32

    # LayerNorm over d_model (H = sublane axis), eps = 1e-5 (PyTorch default), f32.
    mean = jnp.mean(x, axis=1, keepdims=True)                 # (B, 1, L)
    xc = x - mean
    var = jnp.mean(xc * xc, axis=1, keepdims=True)
    z = xc * jax.lax.rsqrt(var + 1e-5)
    z = z * gamma_ref[...] + beta_ref[...]                    # (B, H, L); gamma/beta (1,H,1)

    # Channel-major view so the depthwise conv is a per-channel MXU matmul with the
    # batch folded into the free dimension.
    z_hbm = pltpu.einshape("bhm->hbm", z)                     # (H, B, L)

    # Bidirectional depthwise long conv (+ D skip folded into the Toeplitz diagonal):
    #   y[h, b, l] = sum_m z[h, b, m] * Tt[h, m, l]
    # bf16 operands, f32 accumulation on the MXU.
    y_hbl = jnp.einsum("hbm,hml->hbl",
                       z_hbm.astype(jnp.bfloat16), tmat_ref[...],
                       preferred_element_type=jnp.float32)    # (H, B, tl) f32

    # Back to channels-first; exact (erf) GELU in f32 (matches torch.nn.GELU()).
    y = pltpu.einshape("hbl->bhl", y_hbl)                     # (B, H, tl)
    y = 0.5 * y * (1.0 + jax.lax.erf(y * (2.0 ** -0.5)))

    # Pointwise output linear (Conv1d H->H): single (B*tl, H) x (H, H) MXU matmul.
    rows = jnp.transpose(y, (0, 2, 1)).reshape(B * tl, H)     # (B*tl, H)
    out = jnp.dot(rows.astype(jnp.bfloat16), wT_ref[...],
                  preferred_element_type=jnp.float32) + bout_ref[...]

    # Dropout is identity (dropout = 0.0); residual add with the L-tile view of x.
    x_rows = jnp.transpose(xres_ref[...], (0, 2, 1)).reshape(B * tl, H)
    out = out + x_rows

    # Store channels-first (lane dim = tl; lane-dense whenever the L tile is >= 128).
    o_ref[...] = jnp.transpose(out.reshape(B, tl, H), (0, 2, 1)).astype(o_ref.dtype)


# --------------------------- parameter setup glue ----------------------------

def make_ssm_conv_kernel(key, H, N, L, channels=2):
    """Diagonal-SSM (S4D-style) convolution kernel, shape (channels, H, L)."""
    n2 = N // 2
    k_dt, k_c = jax.random.split(key)
    dt_min, dt_max = 1e-3, 1e-1
    log_dt = jnp.log(dt_min) + jax.random.uniform(k_dt, (H,)) * (
        jnp.log(dt_max) - jnp.log(dt_min))
    dt = jnp.exp(log_dt)                                    # (H,)
    A = -0.5 + 1j * jnp.pi * jnp.arange(n2)                 # (n2,) S4D-Lin
    Cr = jax.random.normal(k_c, (channels, H, n2, 2), jnp.float32)
    C = (Cr[..., 0] + 1j * Cr[..., 1]) * (0.5 ** 0.5)       # (channels, H, n2)
    dtA = dt[:, None] * A[None, :]                          # (H, n2)
    dA = jnp.exp(dtA)
    dB = (dA - 1.0) / A                                     # ZOH, B = 1
    pows = jnp.exp(dtA[:, :, None] * jnp.arange(L)[None, None, :])   # (H, n2, L)
    k = 2.0 * jnp.real(jnp.einsum('chn,hnl->chl', C * dB[None], pows))
    return k.astype(jnp.float32)                            # (channels, H, L)


def build_toeplitz_t(k_fwd, k_bwd, D):
    """Transposed Toeplitz operator Tt[h, m, l] = k_fwd[h, l-m] (m<=l) else
    k_bwd[h, m-l-1], with the D skip added on the diagonal.  Shape (H, L, L)."""
    H, L = k_fwd.shape
    li = jnp.arange(L)[None, :]                             # output position l
    mi = jnp.arange(L)[:, None]                             # input position  m
    diff = li - mi                                          # (L, L): l - m
    fwd = jnp.where(diff >= 0, k_fwd[:, jnp.clip(diff, 0, L - 1)], 0.0)       # (H,L,L)
    bwd = jnp.where(diff < 0, k_bwd[:, jnp.clip(-diff - 1, 0, L - 1)], 0.0)   # (H,L,L)
    t = fwd + bwd
    t = t + D.reshape(-1)[:, None, None] * jnp.eye(L, dtype=t.dtype)[None]
    return t.astype(jnp.float32)


# --------------------------------- wrapper -----------------------------------

def s4_layer_forward(x, gamma, beta, ssm_kernel, D, W_out, b_out, *, tile_l=None):
    """x: (B, d_model, L) float32.  Returns (out (B, d_model, L), None)."""
    B, H, L = x.shape
    if tile_l is None:
        tile_l = L if L <= 128 else 128      # lane-dense 128-wide L tiles at real sizes
    assert L % tile_l == 0
    n_lt = L // tile_l

    # Toeplitz conv operator (dominant HBM/VMEM buffer) in bf16 for the MXU.
    tmatT = build_toeplitz_t(ssm_kernel[0], ssm_kernel[1], D).astype(jnp.bfloat16)

    gamma3 = gamma.reshape(1, H, 1).astype(jnp.float32)
    beta3 = beta.reshape(1, H, 1).astype(jnp.float32)
    wT = jnp.transpose(W_out).astype(jnp.bfloat16)          # (H_in, H_out)
    b2 = b_out.reshape(1, H).astype(jnp.float32)

    out = pl.pallas_call(
        _s4_layer_kernel,
        out_shape=jax.ShapeDtypeStruct((B, H, L), x.dtype),
        grid_spec=pltpu.PrefetchScalarGridSpec(
            num_scalar_prefetch=0,
            grid=(n_lt,),
            in_specs=[
                # full-L view of x: LayerNorm stats + conv contraction
                # (constant index_map -> stays resident across L tiles, no re-DMA)
                pl.BlockSpec((B, H, L), lambda li: (0, 0, 0)),
                # L-tile view of x for the residual / store path
                pl.BlockSpec((B, H, tile_l), lambda li: (0, 0, li)),
                pl.BlockSpec((1, H, 1), lambda li: (0, 0, 0)),        # gamma
                pl.BlockSpec((1, H, 1), lambda li: (0, 0, 0)),        # beta
                # L-tiled Toeplitz operator: bounds resident VMEM to (H, L, tile_l)
                pl.BlockSpec((H, L, tile_l), lambda li: (0, 0, li)),
                pl.BlockSpec((H, H), lambda li: (0, 0)),              # W_out^T (bf16)
                pl.BlockSpec((1, H), lambda li: (0, 0)),              # output bias
            ],
            out_specs=pl.BlockSpec((B, H, tile_l), lambda li: (0, 0, li)),
        ),
        compiler_params=pltpu.CompilerParams(
            dimension_semantics=("parallel",),      # independent L tiles -> megacore
            vmem_limit_bytes=48 * 1024 * 1024,      # raise scoped VMEM, < v7x 64 MiB
        ),
    )(x, x, gamma3, beta3, tmatT, wT, b2)

    return out, None


# ------------------------------ pure-JAX reference ---------------------------

def s4_layer_ref(x, gamma, beta, ssk, D, W_out, b_out):
    """FFT-based f32 reference mirroring the PyTorch S4 forward (for validation)."""
    B, H, L = x.shape
    xt = jnp.transpose(x, (0, 2, 1))
    mu = xt.mean(-1, keepdims=True)
    var = ((xt - mu) ** 2).mean(-1, keepdims=True)
    zt = (xt - mu) / jnp.sqrt(var + 1e-5) * gamma + beta
    z = jnp.transpose(zt, (0, 2, 1))                        # (B, H, L)

    k0, k1 = ssk[0], ssk[1]
    k_full = jnp.pad(k0, ((0, 0), (0, L))) + jnp.pad(jnp.flip(k1, -1), ((0, 0), (L, 0)))
    kf = jnp.fft.rfft(k_full, n=2 * L, axis=-1)
    uf = jnp.fft.rfft(z, n=2 * L, axis=-1)
    y = jnp.fft.irfft(uf * kf[None], n=2 * L, axis=-1)[..., :L]
    y = y + D[0][None, :, None] * z
    y = 0.5 * y * (1.0 + jax.lax.erf(y * (2.0 ** -0.5)))
    y = jnp.einsum('oh,bhl->bol', W_out, y) + b_out[None, :, None]
    return y + x


# ----------------------------------- main ------------------------------------

if __name__ == "__main__":
    B, H, L, N = 2, 32, 16, 128                 # batch, d_model, seq len, d_state
    key = jax.random.PRNGKey(0)
    kx, kk, kd, kw, kb = jax.random.split(key, 5)

    x = jax.random.normal(kx, (B, H, L), jnp.float32)

    # LayerNorm params (PyTorch default init)
    gamma = jnp.ones((H,), jnp.float32)
    beta = jnp.zeros((H,), jnp.float32)

    # S4 params (deterministic synthetic init)
    ssk = make_ssm_conv_kernel(kk, H, N, L, channels=2)     # (2, H, L)
    D = jax.random.normal(kd, (1, H), jnp.float32)          # skip (channels=1, H)
    W_out = jax.random.normal(kw, (H, H), jnp.float32) / jnp.sqrt(H)
    b_out = jax.random.normal(kb, (H,), jnp.float32) / jnp.sqrt(H)

    out, _ = s4_layer_forward(x, gamma, beta, ssk, D, W_out, b_out)
    out = jax.block_until_ready(out)

    ref = s4_layer_ref(x, gamma, beta, ssk, D, W_out, b_out)
    err = float(jnp.max(jnp.abs(out - ref)))
    rel = float(jnp.linalg.norm(out - ref) / jnp.linalg.norm(ref))

    assert out.shape == (B, H, L)
    assert bool(jnp.all(jnp.isfinite(out)))
    # Conv Toeplitz + output-linear operands are bf16 (f32 accumulation), reference is
    # pure f32 FFT -> allow bf16-level error.
    assert err < 6e-2 and rel < 2e-2, f"max abs err {err}, rel l2 err {rel}"

    print("KERNEL_OK")
</pallas_src>

<mosaic_0001>
module attributes {stable_mosaic.version = 11 : i64} {
  func.func @_s4_layer_kernel(%arg0: i32, %arg1: memref<2x32x16xf32, #tpu.memory_space<vmem>>, %arg2: memref<2x32x16xf32, #tpu.memory_space<vmem>>, %arg3: memref<1x32x1xf32, #tpu.memory_space<vmem>>, %arg4: memref<1x32x1xf32, #tpu.memory_space<vmem>>, %arg5: memref<32x16x16xbf16, #tpu.memory_space<vmem>>, %arg6: memref<32x32xbf16, #tpu.memory_space<vmem>>, %arg7: memref<1x32xf32, #tpu.memory_space<vmem>>, %arg8: memref<2x32x16xf32, #tpu.memory_space<vmem>>) attributes {dimension_semantics = [#tpu.dimension_semantics<parallel>], iteration_bounds = array<i64: 1>, scalar_prefetch = 0 : i64, scratch_operands = 0 : i64, tpu.core_type = #tpu.core_type<tc>, window_params = [{pipeline_mode = #tpu.pipeline_mode<synchronous>, transform_indices = @transform_0, window_bounds = array<i64: 2, 32, 16>}, {transform_indices = @transform_1, window_bounds = array<i64: 2, 32, 16>}, {pipeline_mode = #tpu.pipeline_mode<synchronous>, transform_indices = @transform_2, window_bounds = array<i64: 1, 32, 1>}, {pipeline_mode = #tpu.pipeline_mode<synchronous>, transform_indices = @transform_3, window_bounds = array<i64: 1, 32, 1>}, {transform_indices = @transform_4, window_bounds = array<i64: 32, 16, 16>}, {pipeline_mode = #tpu.pipeline_mode<synchronous>, transform_indices = @transform_5, window_bounds = array<i64: 32, 32>}, {pipeline_mode = #tpu.pipeline_mode<synchronous>, transform_indices = @transform_6, window_bounds = array<i64: 1, 32>}, {transform_indices = @transform_7, window_bounds = array<i64: 2, 32, 16>}]} {
    %c0 = arith.constant 0 : index
    %c0_0 = arith.constant 0 : index
    %c0_1 = arith.constant 0 : index
    %0 = vector.load %arg1[%c0, %c0_0, %c0_1] : memref<2x32x16xf32, #tpu.memory_space<vmem>>, vector<2x32x16xf32>
    %cst = arith.constant dense<0.000000e+00> : vector<2x16xf32>
    %1 = vector.multi_reduction <add>, %0, %cst [1] : vector<2x32x16xf32> to vector<2x16xf32>
    %2 = vector.shape_cast %1 : vector<2x16xf32> to vector<2x1x16xf32>
    %cst_2 = arith.constant 3.200000e+01 : f32
    %3 = vector.broadcast %cst_2 : f32 to vector<2x1x16xf32>
    %4 = arith.divf %2, %3 : vector<2x1x16xf32>
    %5 = vector.broadcast %4 : vector<2x1x16xf32> to vector<2x32x16xf32>
    %6 = arith.subf %0, %5 : vector<2x32x16xf32>
    %7 = arith.mulf %6, %6 : vector<2x32x16xf32>
    %cst_3 = arith.constant dense<0.000000e+00> : vector<2x16xf32>
    %8 = vector.multi_reduction <add>, %7, %cst_3 [1] : vector<2x32x16xf32> to vector<2x16xf32>
    %9 = vector.shape_cast %8 : vector<2x16xf32> to vector<2x1x16xf32>
    %cst_4 = arith.constant 3.200000e+01 : f32
    %10 = vector.broadcast %cst_4 : f32 to vector<2x1x16xf32>
    %11 = arith.divf %9, %10 : vector<2x1x16xf32>
    %cst_5 = arith.constant 9.99999974E-6 : f32
    %12 = vector.broadcast %cst_5 : f32 to vector<2x1x16xf32>
    %13 = arith.addf %11, %12 : vector<2x1x16xf32>
    %14 = math.rsqrt %13 : vector<2x1x16xf32>
    %15 = vector.broadcast %14 : vector<2x1x16xf32> to vector<2x32x16xf32>
    %16 = arith.mulf %6, %15 : vector<2x32x16xf32>
    %c0_6 = arith.constant 0 : index
    %c0_7 = arith.constant 0 : index
    %c0_8 = arith.constant 0 : index
    %17 = vector.load %arg3[%c0_6, %c0_7, %c0_8] : memref<1x32x1xf32, #tpu.memory_space<vmem>>, vector<1x32x1xf32>
    %18 = vector.broadcast %17 : vector<1x32x1xf32> to vector<2x32x16xf32>
    %19 = arith.mulf %16, %18 : vector<2x32x16xf32>
    %c0_9 = arith.constant 0 : index
    %c0_10 = arith.constant 0 : index
    %c0_11 = arith.constant 0 : index
    %20 = vector.load %arg4[%c0_9, %c0_10, %c0_11] : memref<1x32x1xf32, #tpu.memory_space<vmem>>, vector<1x32x1xf32>
    %21 = vector.broadcast %20 : vector<1x32x1xf32> to vector<2x32x16xf32>
    %22 = arith.addf %19, %21 : vector<2x32x16xf32>
    %23 = tpu.transpose %22, [1, 0, 2] : vector<2x32x16xf32> -> vector<32x2x16xf32>
    %24 = arith.truncf %23 : vector<32x2x16xf32> to vector<32x2x16xbf16>
    %c0_12 = arith.constant 0 : index
    %c0_13 = arith.constant 0 : index
    %c0_14 = arith.constant 0 : index
    %25 = vector.load %arg5[%c0_12, %c0_13, %c0_14] : memref<32x16x16xbf16, #tpu.memory_space<vmem>>, vector<32x16x16xbf16>
    "tpu.trace_start"() <{level = 10 : i32, message = "hbm,hml->hbl"}> : () -> ()
    %cst_15 = arith.constant dense<0.000000e+00> : vector<32x2x16xf32>
    %26 = tpu.matmul %24, %25, %cst_15 {dimension_numbers = #tpu.dot_dimension_numbers<[2], [1], [1], [2], [0, 0, 0, 1, 1, 2], [0], [0]>} : vector<32x2x16xbf16>, vector<32x16x16xbf16>, vector<32x2x16xf32> -> vector<32x2x16xf32>
    "tpu.trace_stop"() : () -> ()
    %27 = tpu.transpose %26, [1, 0, 2] : vector<32x2x16xf32> -> vector<2x32x16xf32>
    %cst_16 = arith.constant 5.000000e-01 : f32
    %28 = vector.broadcast %cst_16 : f32 to vector<2x32x16xf32>
    %29 = arith.mulf %28, %27 : vector<2x32x16xf32>
    %cst_17 = arith.constant 0.707106769 : f32
    %30 = vector.broadcast %cst_17 : f32 to vector<2x32x16xf32>
    %31 = arith.mulf %27, %30 : vector<2x32x16xf32>
    %32 = math.erf %31 : vector<2x32x16xf32>
    %cst_18 = arith.constant 1.000000e+00 : f32
    %33 = vector.broadcast %cst_18 : f32 to vector<2x32x16xf32>
    %34 = arith.addf %33, %32 : vector<2x32x16xf32>
    %35 = arith.mulf %29, %34 : vector<2x32x16xf32>
    %36 = tpu.transpose %35, [0, 2, 1] : vector<2x32x16xf32> -> vector<2x16x32xf32>
    %37 = vector.shape_cast %36 : vector<2x16x32xf32> to vector<32x32xf32>
    %38 = arith.truncf %37 : vector<32x32xf32> to vector<32x32xbf16>
    %c0_19 = arith.constant 0 : index
    %c0_20 = arith.constant 0 : index
    %39 = vector.load %arg6[%c0_19, %c0_20] : memref<32x32xbf16, #tpu.memory_space<vmem>>, vector<32x32xbf16>
    %cst_21 = arith.constant dense<0.000000e+00> : vector<32x32xf32>
    %40 = tpu.matmul %38, %39, %cst_21 {dimension_numbers = #tpu.dot_dimension_numbers<[1], [0], [0], [1], [0, 0, 1, 1], [], []>} : vector<32x32xbf16>, vector<32x32xbf16>, vector<32x32xf32> -> vector<32x32xf32>
    %c0_22 = arith.constant 0 : index
    %c0_23 = arith.constant 0 : index
    %41 = vector.load %arg7[%c0_22, %c0_23] : memref<1x32xf32, #tpu.memory_space<vmem>>, vector<1x32xf32>
    %42 = vector.broadcast %41 : vector<1x32xf32> to vector<32x32xf32>
    %43 = arith.addf %40, %42 : vector<32x32xf32>
    %c0_24 = arith.constant 0 : index
    %c0_25 = arith.constant 0 : index
    %c0_26 = arith.constant 0 : index
    %44 = vector.load %arg2[%c0_24, %c0_25, %c0_26] : memref<2x32x16xf32, #tpu.memory_space<vmem>>, vector<2x32x16xf32>
    %45 = tpu.transpose %44, [0, 2, 1] : vector<2x32x16xf32> -> vector<2x16x32xf32>
    %46 = vector.shape_cast %45 : vector<2x16x32xf32> to vector<32x32xf32>
    %47 = arith.addf %43, %46 : vector<32x32xf32>
    %48 = vector.shape_cast %47 : vector<32x32xf32> to vector<2x16x32xf32>
    %49 = tpu.transpose %48, [0, 2, 1] : vector<2x16x32xf32> -> vector<2x32x16xf32>
    %c0_27 = arith.constant 0 : index
    %c0_28 = arith.constant 0 : index
    %c0_29 = arith.constant 0 : index
    %50 = vector.load %arg8[%c0_27, %c0_28, %c0_29] : memref<2x32x16xf32, #tpu.memory_space<vmem>>, vector<2x32x16xf32>
    tpu.vector_store %arg8[%c0_27, %c0_28, %c0_29], %49 {strides = array<i32>} : memref<2x32x16xf32, #tpu.memory_space<vmem>>, vector<2x32x16xf32>,
    return
  }
  func.func @transform_0(%arg0: i32) -> (i32, i32, i32) {
    %c0_i32 = arith.constant 0 : i32
    %c0_i32_0 = arith.constant 0 : i32
    %c0_i32_1 = arith.constant 0 : i32
    %c0_i32_2 = arith.constant 0 : i32
    return %c0_i32, %c0_i32_0, %c0_i32_1 : i32, i32, i32
  }
  func.func @transform_1(%arg0: i32) -> (i32, i32, i32) {
    %c0_i32 = arith.constant 0 : i32
    %c0_i32_0 = arith.constant 0 : i32
    %c0_i32_1 = arith.constant 0 : i32
    return %c0_i32, %c0_i32_0, %arg0 : i32, i32, i32
  }
  func.func @transform_2(%arg0: i32) -> (i32, i32, i32) {
    %c0_i32 = arith.constant 0 : i32
    %c0_i32_0 = arith.constant 0 : i32
    %c0_i32_1 = arith.constant 0 : i32
    %c0_i32_2 = arith.constant 0 : i32
    return %c0_i32, %c0_i32_0, %c0_i32_1 : i32, i32, i32
  }
  func.func @transform_3(%arg0: i32) -> (i32, i32, i32) {
    %c0_i32 = arith.constant 0 : i32
    %c0_i32_0 = arith.constant 0 : i32
    %c0_i32_1 = arith.constant 0 : i32
    %c0_i32_2 = arith.constant 0 : i32
    return %c0_i32, %c0_i32_0, %c0_i32_1 : i32, i32, i32
  }
  func.func @transform_4(%arg0: i32) -> (i32, i32, i32) {
    %c0_i32 = arith.constant 0 : i32
    %c0_i32_0 = arith.constant 0 : i32
    %c0_i32_1 = arith.constant 0 : i32
    return %c0_i32, %c0_i32_0, %arg0 : i32, i32, i32
  }
  func.func @transform_5(%arg0: i32) -> (i32, i32) {
    %c0_i32 = arith.constant 0 : i32
    %c0_i32_0 = arith.constant 0 : i32
    %c0_i32_1 = arith.constant 0 : i32
    return %c0_i32, %c0_i32_0 : i32, i32
  }
  func.func @transform_6(%arg0: i32) -> (i32, i32) {
    %c0_i32 = arith.constant 0 : i32
    %c0_i32_0 = arith.constant 0 : i32
    %c0_i32_1 = arith.constant 0 : i32
    return %c0_i32, %c0_i32_0 : i32, i32
  }
  func.func @transform_7(%arg0: i32) -> (i32, i32, i32) {
    %c0_i32 = arith.constant 0 : i32
    %c0_i32_0 = arith.constant 0 : i32
    %c0_i32_1 = arith.constant 0 : i32
    return %c0_i32, %c0_i32_0, %arg0 : i32, i32, i32
  }
}

</mosaic_0001>

<llo_original>
// kernel: tpu_custom_call.1
$region0: #{tpu_custom_call.1}
  #allocation0 [shape = 'u32[]', space=smem, size = 0x4, offset = 0x4, fixed_abs, tag = 'smem constant byte address 0x4 - core index']
  #allocation1 [shape = 'u32[72,128]{1,0:T(1,128)}', space=vmem, size = 0x9000, scoped, tag = 'internal scratch']
  %s0 = inlined_call_operand.vmem [shape: f32[2,32,16], index: 0, kind: input, shape index: {}]
  %s1 = inlined_call_operand.vmem [shape: f32[2,32,16], index: 1, kind: input, shape index: {}]
  %s2 = inlined_call_operand.vmem [shape: f32[1,32,1], index: 2, kind: input, shape index: {}]
  %s3 = inlined_call_operand.vmem [shape: f32[1,32,1], index: 3, kind: input, shape index: {}]
  %s4 = inlined_call_operand.vmem [shape: bf16[32,16,16], index: 4, kind: input, shape index: {}]
  %s5 = inlined_call_operand.vmem [shape: bf16[32,32], index: 5, kind: input, shape index: {}]
  %s6 = inlined_call_operand.vmem [shape: f32[1,32], index: 6, kind: input, shape index: {}]
  %s7 = inlined_call_operand.vmem [shape: f32[2,32,16], index: 7, kind: output, shape index: {}]
  %s8 = sld [smem:[#allocation0]]
  $region38: #{tpu_custom_call.1} parent=0
    _
  %s10 = ssub.s32 1, %s8
  %s11 = scalar_select 0, %s10, %s8
  // Predicated region
  $region2: #{tpu_custom_call.1} parent=0 // pred_check
    _
  $region3: #{tpu_custom_call.1} parent=0 // pred_check_branch
    %13 = sbr.rel (0) target = $region5
  $region4: #{tpu_custom_call.1} parent=0 // pred_region
    _
  $region5: #{tpu_custom_call.1} parent=0 // pred_fallthru
    _
  // Predicated region
  $region6: #{tpu_custom_call.1} parent=0 // pred_check
    _
  $region7: #{tpu_custom_call.1} parent=0 // pred_check_branch
    %15 = sbr.rel (0) target = $region9
  $region8: #{tpu_custom_call.1} parent=0 // pred_region
    _
  $region9: #{tpu_custom_call.1} parent=0 // pred_fallthru
    _
  // Predicated region
  $region10: #{tpu_custom_call.1} parent=0 // pred_check
    _
  $region11: #{tpu_custom_call.1} parent=0 // pred_check_branch
    %17 = sbr.rel (0) target = $region13
  $region12: #{tpu_custom_call.1} parent=0 // pred_region
    _
  $region13: #{tpu_custom_call.1} parent=0 // pred_fallthru
    _
  // Predicated region
  $region14: #{tpu_custom_call.1} parent=0 // pred_check
    _
  $region15: #{tpu_custom_call.1} parent=0 // pred_check_branch
    %19 = sbr.rel (0) target = $region17
  $region16: #{tpu_custom_call.1} parent=0 // pred_region
    _
  $region17: #{tpu_custom_call.1} parent=0 // pred_fallthru
    _
  // Predicated region
  $region18: #{tpu_custom_call.1} parent=0 // pred_check
    _
  $region19: #{tpu_custom_call.1} parent=0 // pred_check_branch
    %21 = sbr.rel (0) target = $region21
  $region20: #{tpu_custom_call.1} parent=0 // pred_region
    _
  $region21: #{tpu_custom_call.1} parent=0 // pred_fallthru
    _
  // Predicated region
  $region22: #{tpu_custom_call.1} parent=0 // pred_check
    _
  $region23: #{tpu_custom_call.1} parent=0 // pred_check_branch
    %23 = sbr.rel (0) target = $region25
  $region24: #{tpu_custom_call.1} parent=0 // pred_region
    _
  $region25: #{tpu_custom_call.1} parent=0 // pred_fallthru
    _
  // Predicated region
  $region26: #{tpu_custom_call.1} parent=0 // pred_check
    _
  $region27: #{tpu_custom_call.1} parent=0 // pred_check_branch
    %25 = sbr.rel (0) target = $region29
  $region28: #{tpu_custom_call.1} parent=0 // pred_region
    _
  $region29: #{tpu_custom_call.1} parent=0 // pred_fallthru
    _
  %v27 = vld [vmem:[%s0] sm:$0xff]
  %v28 = vld [vmem:[%s0 + $0x8] sm:$0xff]
  %v29 = vld [vmem:[%s0 + $0x10] sm:$0xff]
  %v30 = vld [vmem:[%s0 + $0x18] sm:$0xff]
  %v31 = vld [vmem:[%s0 + $0x20] sm:$0xff]
  %v32 = vld [vmem:[%s0 + $0x28] sm:$0xff]
  %v33 = vld [vmem:[%s0 + $0x30] sm:$0xff]
  %v34 = vld [vmem:[%s0 + $0x38] sm:$0xff]
  %vm35 = vcmask 130048
  %v36 = vsel %vm35, %v27, 0.0
  %v37 = vsel %vm35, %v28, 0.0
  %v38 = vadd.f32 %v36, %v37
  %v39 = vsel %vm35, %v29, 0.0
  %v40 = vadd.f32 %v38, %v39
  %v41 = vsel %vm35, %v30, 0.0
  %v42 = vadd.f32 %v40, %v41
  %v43 = vrot.slane %v42, 4
  %v44 = vadd.f32 %v42, %v43
  %v45 = vrot.slane %v44, 2
  %v46 = vadd.f32 %v44, %v45
  %v47 = vrot.slane %v46, 1
  %v48 = vadd.f32 %v46, %v47
  %v49 = vsel %vm35, %v31, 0.0
  %v50 = vsel %vm35, %v32, 0.0
  %v51 = vadd.f32 %v49, %v50
  %v52 = vsel %vm35, %v33, 0.0
  %v53 = vadd.f32 %v51, %v52
  %v54 = vsel %vm35, %v34, 0.0
  %v55 = vadd.f32 %v53, %v54
  %v56 = vrot.slane %v55, 4
  %v57 = vadd.f32 %v55, %v56
  %v58 = vrot.slane %v57, 2
  %v59 = vadd.f32 %v57, %v58
  %v60 = vrot.slane %v59, 1
  %v61 = vadd.f32 %v59, %v60
  %v62 = vrcp.pop 32.0
  %v63 = vmul.f32 32.0, %v62
  %v64 = vsub.f32 1.0, %v63
  %v65 = vmul.f32 %v62, %v64
  %v66 = vadd.f32 %v62, %v65
  %vm67 = vweird.f32 %v62
  %v68 = vsel %vm67, %v62, %v66
  %v69 = vmul.f32 %v48, %v68
  %v70 = vmul.f32 %v61, %v68
  %v71 = vsub.f32 %v27, %v69
  %v72 = vsub.f32 %v28, %v69
  %v73 = vsub.f32 %v29, %v69
  %v74 = vsub.f32 %v30, %v69
  %v75 = vsub.f32 %v31, %v70
  %v76 = vsub.f32 %v32, %v70
  %v77 = vsub.f32 %v33, %v70
  %v78 = vsub.f32 %v34, %v70
  %v79 = vmul.f32 %v71, %v71
  %v80 = vmul.f32 %v72, %v72
  %v81 = vmul.f32 %v73, %v73
  %v82 = vmul.f32 %v74, %v74
  %v83 = vmul.f32 %v75, %v75
  %v84 = vmul.f32 %v76, %v76
  %v85 = vmul.f32 %v77, %v77
  %v86 = vmul.f32 %v78, %v78
  %v87 = vsel %vm35, %v79, 0.0
  %v88 = vsel %vm35, %v80, 0.0
  %v89 = vadd.f32 %v87, %v88
  %v90 = vsel %vm35, %v81, 0.0
  %v91 = vadd.f32 %v89, %v90
  %v92 = vsel %vm35, %v82, 0.0
  %v93 = vadd.f32 %v91, %v92
  %v94 = vrot.slane %v93, 4
  %v95 = vadd.f32 %v93, %v94
  %v96 = vrot.slane %v95, 2
  %v97 = vadd.f32 %v95, %v96
  %v98 = vrot.slane %v97, 1
  %v99 = vadd.f32 %v97, %v98
  %v100 = vsel %vm35, %v83, 0.0
  %v101 = vsel %vm35, %v84, 0.0
  %v102 = vadd.f32 %v100, %v101
  %v103 = vsel %vm35, %v85, 0.0
  %v104 = vadd.f32 %v102, %v103
  %v105 = vsel %vm35, %v86, 0.0
  %v106 = vadd.f32 %v104, %v105
  %v107 = vrot.slane %v106, 4
  %v108 = vadd.f32 %v106, %v107
  %v109 = vrot.slane %v108, 2
  %v110 = vadd.f32 %v108, %v109
  %v111 = vrot.slane %v110, 1
  %v112 = vadd.f32 %v110, %v111
  %v113 = vmul.f32 %v99, %v68
  %v114 = vmul.f32 %v112, %v68
  %v115 = vadd.f32 %v113, 1e-05
  %v116 = vadd.f32 %v114, 1e-05
  %v117 = vrsqrt.pop %v115
  %v118 = vmul.f32 %v117, %v115
  %v119 = vmul.f32 %v118, %v117
  %v120 = vmul.f32 0.5, %v119
  %v121 = vsub.f32 1.5, %v120
  %v122 = vmul.f32 %v117, %v121
  %vm123 = vweird.f32 %v115
  %vm124 = vweird.f32 %v117
  %vm125 = vmor %vm123, %vm124
  %v126 = vsel %vm125, %v117, %v122
  %v127 = vrsqrt.pop %v116
  %v128 = vmul.f32 %v127, %v116
  %v129 = vmul.f32 %v128, %v127
  %v130 = vmul.f32 0.5, %v129
  %v131 = vsub.f32 1.5, %v130
  %v132 = vmul.f32 %v127, %v131
  %vm133 = vweird.f32 %v116
  %vm134 = vweird.f32 %v127
  %vm135 = vmor %vm133, %vm134
  %v136 = vsel %vm135, %v127, %v132
  %v137 = vmul.f32 %v71, %v126
  %v138 = vmul.f32 %v72, %v126
  %v139 = vmul.f32 %v73, %v126
  %v140 = vmul.f32 %v74, %v126
  %v141 = vmul.f32 %v75, %v136
  %v142 = vmul.f32 %v76, %v136
  %v143 = vmul.f32 %v77, %v136
  %v144 = vmul.f32 %v78, %v136
  %v145 = vld [vmem:[%s2] sm:$0xff]
  %v146 = vld [vmem:[%s2 + $0x8] sm:$0xff]
  %v147 = vld [vmem:[%s2 + $0x10] sm:$0xff]
  %v148 = vld [vmem:[%s2 + $0x18] sm:$0xff]
  %150 = vset.pattern.permute.xlu0 0
  %151 = vperm.xlu0 %150, %v145
  %v152 = vpop.permute.xlu0 %151
  %155 = vset.pattern.permute.xlu0 0
  %156 = vperm.xlu0 %155, %v146
  %v157 = vpop.permute.xlu0 %156
  %160 = vset.pattern.permute.xlu0 0
  %161 = vperm.xlu0 %160, %v147
  %v162 = vpop.permute.xlu0 %161
  %165 = vset.pattern.permute.xlu0 0
  %166 = vperm.xlu0 %165, %v148
  %v167 = vpop.permute.xlu0 %166
  %v169 = vmul.f32 %v137, %v152
  %v170 = vmul.f32 %v138, %v157
  %v171 = vmul.f32 %v139, %v162
  %v172 = vmul.f32 %v140, %v167
  %v173 = vmul.f32 %v141, %v152
  %v174 = vmul.f32 %v142, %v157
  %v175 = vmul.f32 %v143, %v162
  %v176 = vmul.f32 %v144, %v167
  %v177 = vld [vmem:[%s3] sm:$0xff]
  %v178 = vld [vmem:[%s3 + $0x8] sm:$0xff]
  %v179 = vld [vmem:[%s3 + $0x10] sm:$0xff]
  %v180 = vld [vmem:[%s3 + $0x18] sm:$0xff]
  %182 = vset.pattern.permute.xlu0 0
  %183 = vperm.xlu0 %182, %v177
  %v184 = vpop.permute.xlu0 %183
  %187 = vset.pattern.permute.xlu0 0
  %188 = vperm.xlu0 %187, %v178
  %v189 = vpop.permute.xlu0 %188
  %192 = vset.pattern.permute.xlu0 0
  %193 = vperm.xlu0 %192, %v179
  %v194 = vpop.permute.xlu0 %193
  %197 = vset.pattern.permute.xlu0 0
  %198 = vperm.xlu0 %197, %v180
  %v199 = vpop.permute.xlu0 %198
  %v201 = vadd.f32 %v169, %v184
  %v202 = vadd.f32 %v170, %v189
  %v203 = vadd.f32 %v171, %v194
  %v204 = vadd.f32 %v172, %v199
  %v205 = vadd.f32 %v173, %v184
  %v206 = vadd.f32 %v174, %v189
  %v207 = vadd.f32 %v175, %v194
  %v208 = vadd.f32 %v176, %v199
  %v209 = vrot.slane %v201, 4
  %vm210 = vcmask 1047556
  %v211 = vsel %vm210, 0.0, %v209
  %v213 = vunpack.c.l.s4 1983009808
  %v214 = vunpack.c.0.s8 %v213
  %v215 = vperm.slane %v201, %v214
  %v217 = vunpack.c.l.s4 1983009808
  %v218 = vunpack.c.0.s8 %v217
  %v219 = vperm.slane %v211, %v218
  %v220 = vrot.slane %v205, 4
  %v221 = vsel %vm210, 0.0, %v220
  %v223 = vunpack.c.l.s4 1983009808
  %v224 = vunpack.c.0.s8 %v223
  %v225 = vperm.slane %v205, %v224
  %v227 = vunpack.c.l.s4 1983009808
  %v228 = vunpack.c.0.s8 %v227
  %v229 = vperm.slane %v221, %v228
  %v230 = vrot.slane %v225, 4
  %v231 = vsel %vm210, %v230, %v215
  %v232 = vrot.slane %v215, 4
  %v233 = vsel %vm210, %v225, %v232
  %v235 = vunpack.c.l.s4 1934713408
  %v236 = vunpack.c.0.s8 %v235
  %v237 = vperm.slane %v231, %v236
  %v239 = vunpack.c.l.s4 1934713408
  %v240 = vunpack.c.0.s8 %v239
  %v241 = vperm.slane %v233, %v240
  %v242 = vrot.slane %v229, 4
  %v243 = vsel %vm210, %v242, %v219
  %v244 = vrot.slane %v219, 4
  %v245 = vsel %vm210, %v229, %v244
  %v247 = vunpack.c.l.s4 1934713408
  %v248 = vunpack.c.0.s8 %v247
  %v249 = vperm.slane %v243, %v248
  %v251 = vunpack.c.l.s4 1934713408
  %v252 = vunpack.c.0.s8 %v251
  %v253 = vperm.slane %v245, %v252
  %v254 = vrot.slane %v237, 4
  %v255 = vsel %vm210, 0.0, %v254
  %v256 = vrot.slane %v241, 4
  %v257 = vsel %vm210, 0.0, %v256
  %v258 = vrot.slane %v249, 4
  %v259 = vsel %vm210, 0.0, %v258
  %v260 = vrot.slane %v253, 4
  %v261 = vsel %vm210, 0.0, %v260
  %v262 = vrot.slane %v202, 4
  %v263 = vsel %vm210, 0.0, %v262
  %v265 = vunpack.c.l.s4 1983009808
  %v266 = vunpack.c.0.s8 %v265
  %v267 = vperm.slane %v202, %v266
  %v269 = vunpack.c.l.s4 1983009808
  %v270 = vunpack.c.0.s8 %v269
  %v271 = vperm.slane %v263, %v270
  %v272 = vrot.slane %v206, 4
  %v273 = vsel %vm210, 0.0, %v272
  %v275 = vunpack.c.l.s4 1983009808
  %v276 = vunpack.c.0.s8 %v275
  %v277 = vperm.slane %v206, %v276
  %v279 = vunpack.c.l.s4 1983009808
  %v280 = vunpack.c.0.s8 %v279
  %v281 = vperm.slane %v273, %v280
  %v282 = vrot.slane %v277, 4
  %v283 = vsel %vm210, %v282, %v267
  %v284 = vrot.slane %v267, 4
  %v285 = vsel %vm210, %v277, %v284
  %v287 = vunpack.c.l.s4 1934713408
  %v288 = vunpack.c.0.s8 %v287
  %v289 = vperm.slane %v283, %v288
  %v291 = vunpack.c.l.s4 1934713408
  %v292 = vunpack.c.0.s8 %v291
  %v293 = vperm.slane %v285, %v292
  %v294 = vrot.slane %v281, 4
  %v295 = vsel %vm210, %v294, %v271
  %v296 = vrot.slane %v271, 4
  %v297 = vsel %vm210, %v281, %v296
  %v299 = vunpack.c.l.s4 1934713408
  %v300 = vunpack.c.0.s8 %v299
  %v301 = vperm.slane %v295, %v300
  %v303 = vunpack.c.l.s4 1934713408
  %v304 = vunpack.c.0.s8 %v303
  %v305 = vperm.slane %v297, %v304
  %v306 = vrot.slane %v289, 4
  %v307 = vsel %vm210, 0.0, %v306
  %v308 = vrot.slane %v293, 4
  %v309 = vsel %vm210, 0.0, %v308
  %v310 = vrot.slane %v301, 4
  %v311 = vsel %vm210, 0.0, %v310
  %v312 = vrot.slane %v305, 4
  %v313 = vsel %vm210, 0.0, %v312
  %v314 = vrot.slane %v203, 4
  %v315 = vsel %vm210, 0.0, %v314
  %v317 = vunpack.c.l.s4 1983009808
  %v318 = vunpack.c.0.s8 %v317
  %v319 = vperm.slane %v203, %v318
  %v321 = vunpack.c.l.s4 1983009808
  %v322 = vunpack.c.0.s8 %v321
  %v323 = vperm.slane %v315, %v322
  %v324 = vrot.slane %v207, 4
  %v325 = vsel %vm210, 0.0, %v324
  %v327 = vunpack.c.l.s4 1983009808
  %v328 = vunpack.c.0.s8 %v327
  %v329 = vperm.slane %v207, %v328
  %v331 = vunpack.c.l.s4 1983009808
  %v332 = vunpack.c.0.s8 %v331
  %v333 = vperm.slane %v325, %v332
  %v334 = vrot.slane %v329, 4
  %v335 = vsel %vm210, %v334, %v319
  %v336 = vrot.slane %v319, 4
  %v337 = vsel %vm210, %v329, %v336
  %v339 = vunpack.c.l.s4 1934713408
  %v340 = vunpack.c.0.s8 %v339
  %v341 = vperm.slane %v335, %v340
  %v343 = vunpack.c.l.s4 1934713408
  %v344 = vunpack.c.0.s8 %v343
  %v345 = vperm.slane %v337, %v344
  %v346 = vrot.slane %v333, 4
  %v347 = vsel %vm210, %v346, %v323
  %v348 = vrot.slane %v323, 4
  %v349 = vsel %vm210, %v333, %v348
  %v351 = vunpack.c.l.s4 1934713408
  %v352 = vunpack.c.0.s8 %v351
  %v353 = vperm.slane %v347, %v352
  %v355 = vunpack.c.l.s4 1934713408
  %v356 = vunpack.c.0.s8 %v355
  %v357 = vperm.slane %v349, %v356
  %v358 = vrot.slane %v341, 4
  %v359 = vsel %vm210, 0.0, %v358
  %v360 = vrot.slane %v345, 4
  %v361 = vsel %vm210, 0.0, %v360
  %v362 = vrot.slane %v353, 4
  %v363 = vsel %vm210, 0.0, %v362
  %v364 = vrot.slane %v357, 4
  %v365 = vsel %vm210, 0.0, %v364
  %v366 = vrot.slane %v204, 4
  %v367 = vsel %vm210, 0.0, %v366
  %v369 = vunpack.c.l.s4 1983009808
  %v370 = vunpack.c.0.s8 %v369
  %v371 = vperm.slane %v204, %v370
  %v373 = vunpack.c.l.s4 1983009808
  %v374 = vunpack.c.0.s8 %v373
  %v375 = vperm.slane %v367, %v374
  %v376 = vrot.slane %v208, 4
  %v377 = vsel %vm210, 0.0, %v376
  %v379 = vunpack.c.l.s4 1983009808
  %v380 = vunpack.c.0.s8 %v379
  %v381 = vperm.slane %v208, %v380
  %v383 = vunpack.c.l.s4 1983009808
  %v384 = vunpack.c.0.s8 %v383
  %v385 = vperm.slane %v377, %v384
  %v386 = vrot.slane %v381, 4
  %v387 = vsel %vm210, %v386, %v371
  %v388 = vrot.slane %v371, 4
  %v389 = vsel %vm210, %v381, %v388
  %v391 = vunpack.c.l.s4 1934713408
  %v392 = vunpack.c.0.s8 %v391
  %v393 = vperm.slane %v387, %v392
  %v395 = vunpack.c.l.s4 1934713408
  %v396 = vunpack.c.0.s8 %v395
  %v397 = vperm.slane %v389, %v396
  %v398 = vrot.slane %v385, 4
  %v399 = vsel %vm210, %v398, %v375
  %v400 = vrot.slane %v375, 4
  %v401 = vsel %vm210, %v385, %v400
  %v403 = vunpack.c.l.s4 1934713408
  %v404 = vunpack.c.0.s8 %v403
  %v405 = vperm.slane %v399, %v404
  %v407 = vunpack.c.l.s4 1934713408
  %v408 = vunpack.c.0.s8 %v407
  %v409 = vperm.slane %v401, %v408
  %v410 = vrot.slane %v393, 4
  %v411 = vsel %vm210, 0.0, %v410
  %v412 = vrot.slane %v397, 4
  %v413 = vsel %vm210, 0.0, %v412
  %v414 = vrot.slane %v405, 4
  %v415 = vsel %vm210, 0.0, %v414
  %v416 = vrot.slane %v409, 4
  %v417 = vsel %vm210, 0.0, %v416
  %v418 = vpack.c.bf16 %v237, %v237
  %v419 = vpack.c.bf16 %v255, %v255
  %v420 = vpack.c.bf16 %v241, %v241
  %v421 = vpack.c.bf16 %v257, %v257
  %v422 = vpack.c.bf16 %v249, %v249
  %v423 = vpack.c.bf16 %v259, %v259
  %v424 = vpack.c.bf16 %v253, %v253
  %v425 = vpack.c.bf16 %v261, %v261
  %v426 = vpack.c.bf16 %v289, %v289
  %v427 = vpack.c.bf16 %v307, %v307
  %v428 = vpack.c.bf16 %v293, %v293
  %v429 = vpack.c.bf16 %v309, %v309
  %v430 = vpack.c.bf16 %v301, %v301
  %v431 = vpack.c.bf16 %v311, %v311
  %v432 = vpack.c.bf16 %v305, %v305
  %v433 = vpack.c.bf16 %v313, %v313
  %v434 = vpack.c.bf16 %v341, %v341
  %v435 = vpack.c.bf16 %v359, %v359
  %v436 = vpack.c.bf16 %v345, %v345
  %v437 = vpack.c.bf16 %v361, %v361
  %v438 = vpack.c.bf16 %v353, %v353
  %v439 = vpack.c.bf16 %v363, %v363
  %v440 = vpack.c.bf16 %v357, %v357
  %v441 = vpack.c.bf16 %v365, %v365
  %v442 = vpack.c.bf16 %v393, %v393
  %v443 = vpack.c.bf16 %v411, %v411
  %v444 = vpack.c.bf16 %v397, %v397
  %v445 = vpack.c.bf16 %v413, %v413
  %v446 = vpack.c.bf16 %v405, %v405
  %v447 = vpack.c.bf16 %v415, %v415
  %v448 = vpack.c.bf16 %v409, %v409
  %v449 = vpack.c.bf16 %v417, %v417
  %v450 = vld [vmem:[%s4] sm:$0xf]
  %v451 = vld [vmem:[%s4 + $0x4] sm:$0xf]
  %v452 = vld [vmem:[%s4 + $0x8] sm:$0xf]
  %v453 = vld [vmem:[%s4 + $0xc] sm:$0xf]
  %v454 = vld [vmem:[%s4 + $0x10] sm:$0xf]
  %v455 = vld [vmem:[%s4 + $0x14] sm:$0xf]
  %v456 = vld [vmem:[%s4 + $0x18] sm:$0xf]
  %v457 = vld [vmem:[%s4 + $0x1c] sm:$0xf]
  %v458 = vld [vmem:[%s4 + $0x20] sm:$0xf]
  %v459 = vld [vmem:[%s4 + $0x24] sm:$0xf]
  %v460 = vld [vmem:[%s4 + $0x28] sm:$0xf]
  %v461 = vld [vmem:[%s4 + $0x2c] sm:$0xf]
  %v462 = vld [vmem:[%s4 + $0x30] sm:$0xf]
  %v463 = vld [vmem:[%s4 + $0x34] sm:$0xf]
  %v464 = vld [vmem:[%s4 + $0x38] sm:$0xf]
  %v465 = vld [vmem:[%s4 + $0x3c] sm:$0xf]
  %v466 = vld [vmem:[%s4 + $0x40] sm:$0xf]
  %v467 = vld [vmem:[%s4 + $0x44] sm:$0xf]
  %v468 = vld [vmem:[%s4 + $0x48] sm:$0xf]
  %v469 = vld [vmem:[%s4 + $0x4c] sm:$0xf]
  %v470 = vld [vmem:[%s4 + $0x50] sm:$0xf]
  %v471 = vld [vmem:[%s4 + $0x54] sm:$0xf]
  %v472 = vld [vmem:[%s4 + $0x58] sm:$0xf]
  %v473 = vld [vmem:[%s4 + $0x5c] sm:$0xf]
  %v474 = vld [vmem:[%s4 + $0x60] sm:$0xf]
  %v475 = vld [vmem:[%s4 + $0x64] sm:$0xf]
  %v476 = vld [vmem:[%s4 + $0x68] sm:$0xf]
  %v477 = vld [vmem:[%s4 + $0x6c] sm:$0xf]
  %v478 = vld [vmem:[%s4 + $0x70] sm:$0xf]
  %v479 = vld [vmem:[%s4 + $0x74] sm:$0xf]
  %v480 = vld [vmem:[%s4 + $0x78] sm:$0xf]
  %v481 = vld [vmem:[%s4 + $0x7c] sm:$0xf]
  %v482 = vld [vmem:[%s4 + $0x80] sm:$0xf]
  %v483 = vld [vmem:[%s4 + $0x84] sm:$0xf]
  %v484 = vld [vmem:[%s4 + $0x88] sm:$0xf]
  %v485 = vld [vmem:[%s4 + $0x8c] sm:$0xf]
  %v486 = vld [vmem:[%s4 + $0x90] sm:$0xf]
  %v487 = vld [vmem:[%s4 + $0x94] sm:$0xf]
  %v488 = vld [vmem:[%s4 + $0x98] sm:$0xf]
  %v489 = vld [vmem:[%s4 + $0x9c] sm:$0xf]
  %v490 = vld [vmem:[%s4 + $0xa0] sm:$0xf]
  %v491 = vld [vmem:[%s4 + $0xa4] sm:$0xf]
  %v492 = vld [vmem:[%s4 + $0xa8] sm:$0xf]
  %v493 = vld [vmem:[%s4 + $0xac] sm:$0xf]
  %v494 = vld [vmem:[%s4 + $0xb0] sm:$0xf]
  %v495 = vld [vmem:[%s4 + $0xb4] sm:$0xf]
  %v496 = vld [vmem:[%s4 + $0xb8] sm:$0xf]
  %v497 = vld [vmem:[%s4 + $0xbc] sm:$0xf]
  %v498 = vld [vmem:[%s4 + $0xc0] sm:$0xf]
  %v499 = vld [vmem:[%s4 + $0xc4] sm:$0xf]
  %v500 = vld [vmem:[%s4 + $0xc8] sm:$0xf]
  %v501 = vld [vmem:[%s4 + $0xcc] sm:$0xf]
  %v502 = vld [vmem:[%s4 + $0xd0] sm:$0xf]
  %v503 = vld [vmem:[%s4 + $0xd4] sm:$0xf]
  %v504 = vld [vmem:[%s4 + $0xd8] sm:$0xf]
  %v505 = vld [vmem:[%s4 + $0xdc] sm:$0xf]
  %v506 = vld [vmem:[%s4 + $0xe0] sm:$0xf]
  %v507 = vld [vmem:[%s4 + $0xe4] sm:$0xf]
  %v508 = vld [vmem:[%s4 + $0xe8] sm:$0xf]
  %v509 = vld [vmem:[%s4 + $0xec] sm:$0xf]
  %v510 = vld [vmem:[%s4 + $0xf0] sm:$0xf]
  %v511 = vld [vmem:[%s4 + $0xf4] sm:$0xf]
  %v512 = vld [vmem:[%s4 + $0xf8] sm:$0xf]
  %v513 = vld [vmem:[%s4 + $0xfc] sm:$0xf]
  %v516 = vunpack.c.l.b16 %v450
  %v517 = vunpack.c.l.b16 %v451
  %v518 = vpack.c.b16 %v517, %v516
  %v521 = vsel %vm35, %v418, 0
  %523 = vmatpush.bf16.msra.mxu0 0
  %524 = vmatpush.bf16.msra.mxu0 0
  %525 = vmatpush.bf16.msra.mxu0 0
  %526 = vmatpush.bf16.msra.mxu0 0
  %527 = vmatpush.bf16.msra.mxu0 0
  %528 = vmatpush.bf16.msra.mxu0 0
  %529 = vmatpush.bf16.msra.mxu0 0
  %530 = vmatpush.bf16.msra.mxu0 %v518
  %531 = vmatmul.bf16.gmra.mxu0 %v521
  %v532 = vpop.f32.mrf.mxu0
  %v533 = vadd.f32 0.0, %v532
  %v534 = vpop.f32.mrf.mxu0
  %535 = vdwg.mxu0
  %v538 = vunpack.c.l.b16 %v452
  %v539 = vunpack.c.l.b16 %v453
  %v540 = vpack.c.b16 %v539, %v538
  %v543 = vsel %vm35, %v419, 0
  %545 = vmatpush.bf16.msra.mxu0 0
  %546 = vmatpush.bf16.msra.mxu0 0
  %547 = vmatpush.bf16.msra.mxu0 0
  %548 = vmatpush.bf16.msra.mxu0 0
  %549 = vmatpush.bf16.msra.mxu0 0
  %550 = vmatpush.bf16.msra.mxu0 0
  %551 = vmatpush.bf16.msra.mxu0 0
  %552 = vmatpush.bf16.msra.mxu0 %v540
  %553 = vmatmul.bf16.gmra.mxu0 %v543
  %v554 = vpop.f32.mrf.mxu0
  %v555 = vadd.f32 0.0, %v554
  %v556 = vpop.f32.mrf.mxu0
  %557 = vdwg.mxu0
  %v560 = vunpack.c.l.b16 %v454
  %v561 = vunpack.c.l.b16 %v455
  %v562 = vpack.c.b16 %v561, %v560
  %v565 = vsel %vm35, %v420, 0
  %567 = vmatpush.bf16.msra.mxu0 0
  %568 = vmatpush.bf16.msra.mxu0 0
  %569 = vmatpush.bf16.msra.mxu0 0
  %570 = vmatpush.bf16.msra.mxu0 0
  %571 = vmatpush.bf16.msra.mxu0 0
  %572 = vmatpush.bf16.msra.mxu0 0
  %573 = vmatpush.bf16.msra.mxu0 0
  %574 = vmatpush.bf16.msra.mxu0 %v562
  %575 = vmatmul.bf16.gmra.mxu0 %v565
  %v576 = vpop.f32.mrf.mxu0
  %v577 = vadd.f32 0.0, %v576
  %v578 = vpop.f32.mrf.mxu0
  %579 = vdwg.mxu0
  %v582 = vunpack.c.l.b16 %v456
  %v583 = vunpack.c.l.b16 %v457
  %v584 = vpack.c.b16 %v583, %v582
  %v587 = vsel %vm35, %v421, 0
  %589 = vmatpush.bf16.msra.mxu0 0
  %590 = vmatpush.bf16.msra.mxu0 0
  %591 = vmatpush.bf16.msra.mxu0 0
  %592 = vmatpush.bf16.msra.mxu0 0
  %593 = vmatpush.bf16.msra.mxu0 0
  %594 = vmatpush.bf16.msra.mxu0 0
  %595 = vmatpush.bf16.msra.mxu0 0
  %596 = vmatpush.bf16.msra.mxu0 %v584
  %597 = vmatmul.bf16.gmra.mxu0 %v587
  %v598 = vpop.f32.mrf.mxu0
  %v599 = vadd.f32 0.0, %v598
  %v600 = vpop.f32.mrf.mxu0
  %601 = vdwg.mxu0
  %v604 = vunpack.c.l.b16 %v458
  %v605 = vunpack.c.l.b16 %v459
  %v606 = vpack.c.b16 %v605, %v604
  %v609 = vsel %vm35, %v422, 0
  %611 = vmatpush.bf16.msra.mxu0 0
  %612 = vmatpush.bf16.msra.mxu0 0
  %613 = vmatpush.bf16.msra.mxu0 0
  %614 = vmatpush.bf16.msra.mxu0 0
  %615 = vmatpush.bf16.msra.mxu0 0
  %616 = vmatpush.bf16.msra.mxu0 0
  %617 = vmatpush.bf16.msra.mxu0 0
  %618 = vmatpush.bf16.msra.mxu0 %v606
  %619 = vmatmul.bf16.gmra.mxu0 %v609
  %v620 = vpop.f32.mrf.mxu0
  %v621 = vadd.f32 0.0, %v620
  %v622 = vpop.f32.mrf.mxu0
  %623 = vdwg.mxu0
  %v626 = vunpack.c.l.b16 %v460
  %v627 = vunpack.c.l.b16 %v461
  %v628 = vpack.c.b16 %v627, %v626
  %v631 = vsel %vm35, %v423, 0
  %633 = vmatpush.bf16.msra.mxu0 0
  %634 = vmatpush.bf16.msra.mxu0 0
  %635 = vmatpush.bf16.msra.mxu0 0
  %636 = vmatpush.bf16.msra.mxu0 0
  %637 = vmatpush.bf16.msra.mxu0 0
  %638 = vmatpush.bf16.msra.mxu0 0
  %639 = vmatpush.bf16.msra.mxu0 0
  %640 = vmatpush.bf16.msra.mxu0 %v628
  %641 = vmatmul.bf16.gmra.mxu0 %v631
  %v642 = vpop.f32.mrf.mxu0
  %v643 = vadd.f32 0.0, %v642
  %v644 = vpop.f32.mrf.mxu0
  %645 = vdwg.mxu0
  %v648 = vunpack.c.l.b16 %v462
  %v649 = vunpack.c.l.b16 %v463
  %v650 = vpack.c.b16 %v649, %v648
  %v653 = vsel %vm35, %v424, 0
  %655 = vmatpush.bf16.msra.mxu0 0
  %656 = vmatpush.bf16.msra.mxu0 0
  %657 = vmatpush.bf16.msra.mxu0 0
  %658 = vmatpush.bf16.msra.mxu0 0
  %659 = vmatpush.bf16.msra.mxu0 0
  %660 = vmatpush.bf16.msra.mxu0 0
  %661 = vmatpush.bf16.msra.mxu0 0
  %662 = vmatpush.bf16.msra.mxu0 %v650
  %663 = vmatmul.bf16.gmra.mxu0 %v653
  %v664 = vpop.f32.mrf.mxu0
  %v665 = vadd.f32 0.0, %v664
  %v666 = vpop.f32.mrf.mxu0
  %667 = vdwg.mxu0
  %v670 = vunpack.c.l.b16 %v464
  %v671 = vunpack.c.l.b16 %v465
  %v672 = vpack.c.b16 %v671, %v670
  %v675 = vsel %vm35, %v425, 0
  %677 = vmatpush.bf16.msra.mxu0 0
  %678 = vmatpush.bf16.msra.mxu0 0
  %679 = vmatpush.bf16.msra.mxu0 0
  %680 = vmatpush.bf16.msra.mxu0 0
  %681 = vmatpush.bf16.msra.mxu0 0
  %682 = vmatpush.bf16.msra.mxu0 0
  %683 = vmatpush.bf16.msra.mxu0 0
  %684 = vmatpush.bf16.msra.mxu0 %v672
  %685 = vmatmul.bf16.gmra.mxu0 %v675
  %v686 = vpop.f32.mrf.mxu0
  %v687 = vadd.f32 0.0, %v686
  %v688 = vpop.f32.mrf.mxu0
  %689 = vdwg.mxu0
  %v692 = vunpack.c.l.b16 %v466
  %v693 = vunpack.c.l.b16 %v467
  %v694 = vpack.c.b16 %v693, %v692
  %v697 = vsel %vm35, %v426, 0
  %699 = vmatpush.bf16.msra.mxu0 0
  %700 = vmatpush.bf16.msra.mxu0 0
  %701 = vmatpush.bf16.msra.mxu0 0
  %702 = vmatpush.bf16.msra.mxu0 0
  %703 = vmatpush.bf16.msra.mxu0 0
  %704 = vmatpush.bf16.msra.mxu0 0
  %705 = vmatpush.bf16.msra.mxu0 0
  %706 = vmatpush.bf16.msra.mxu0 %v694
  %707 = vmatmul.bf16.gmra.mxu0 %v697
  %v708 = vpop.f32.mrf.mxu0
  %v709 = vadd.f32 0.0, %v708
  %v710 = vpop.f32.mrf.mxu0
  %711 = vdwg.mxu0
  %v714 = vunpack.c.l.b16 %v468
  %v715 = vunpack.c.l.b16 %v469
  %v716 = vpack.c.b16 %v715, %v714
  %v719 = vsel %vm35, %v427, 0
  %721 = vmatpush.bf16.msra.mxu0 0
  %722 = vmatpush.bf16.msra.mxu0 0
  %723 = vmatpush.bf16.msra.mxu0 0
  %724 = vmatpush.bf16.msra.mxu0 0
  %725 = vmatpush.bf16.msra.mxu0 0
  %726 = vmatpush.bf16.msra.mxu0 0
  %727 = vmatpush.bf16.msra.mxu0 0
  %728 = vmatpush.bf16.msra.mxu0 %v716
  %729 = vmatmul.bf16.gmra.mxu0 %v719
  %v730 = vpop.f32.mrf.mxu0
  %v731 = vadd.f32 0.0, %v730
  %v732 = vpop.f32.mrf.mxu0
  %733 = vdwg.mxu0
  %v736 = vunpack.c.l.b16 %v470
  %v737 = vunpack.c.l.b16 %v471
  %v738 = vpack.c.b16 %v737, %v736
  %v741 = vsel %vm35, %v428, 0
  %743 = vmatpush.bf16.msra.mxu0 0
  %744 = vmatpush.bf16.msra.mxu0 0
  %745 = vmatpush.bf16.msra.mxu0 0
  %746 = vmatpush.bf16.msra.mxu0 0
  %747 = vmatpush.bf16.msra.mxu0 0
  %748 = vmatpush.bf16.msra.mxu0 0
  %749 = vmatpush.bf16.msra.mxu0 0
  %750 = vmatpush.bf16.msra.mxu0 %v738
  %751 = vmatmul.bf16.gmra.mxu0 %v741
  %v752 = vpop.f32.mrf.mxu0
  %v753 = vadd.f32 0.0, %v752
  %v754 = vpop.f32.mrf.mxu0
  %755 = vdwg.mxu0
  %v758 = vunpack.c.l.b16 %v472
  %v759 = vunpack.c.l.b16 %v473
  %v760 = vpack.c.b16 %v759, %v758
  %v763 = vsel %vm35, %v429, 0
  %765 = vmatpush.bf16.msra.mxu0 0
  %766 = vmatpush.bf16.msra.mxu0 0
  %767 = vmatpush.bf16.msra.mxu0 0
  %768 = vmatpush.bf16.msra.mxu0 0
  %769 = vmatpush.bf16.msra.mxu0 0
  %770 = vmatpush.bf16.msra.mxu0 0
  %771 = vmatpush.bf16.msra.mxu0 0
  %772 = vmatpush.bf16.msra.mxu0 %v760
  %773 = vmatmul.bf16.gmra.mxu0 %v763
  %v774 = vpop.f32.mrf.mxu0
  %v775 = vadd.f32 0.0, %v774
  %v776 = vpop.f32.mrf.mxu0
  %777 = vdwg.mxu0
  %v780 = vunpack.c.l.b16 %v474
  %v781 = vunpack.c.l.b16 %v475
  %v782 = vpack.c.b16 %v781, %v780
  %v785 = vsel %vm35, %v430, 0
  %787 = vmatpush.bf16.msra.mxu0 0
  %788 = vmatpush.bf16.msra.mxu0 0
  %789 = vmatpush.bf16.msra.mxu0 0
  %790 = vmatpush.bf16.msra.mxu0 0
  %791 = vmatpush.bf16.msra.mxu0 0
  %792 = vmatpush.bf16.msra.mxu0 0
  %793 = vmatpush.bf16.msra.mxu0 0
  %794 = vmatpush.bf16.msra.mxu0 %v782
  %795 = vmatmul.bf16.gmra.mxu0 %v785
  %v796 = vpop.f32.mrf.mxu0
  %v797 = vadd.f32 0.0, %v796
  %v798 = vpop.f32.mrf.mxu0
  %799 = vdwg.mxu0
  %v802 = vunpack.c.l.b16 %v476
  %v803 = vunpack.c.l.b16 %v477
  %v804 = vpack.c.b16 %v803, %v802
  %v807 = vsel %vm35, %v431, 0
  %809 = vmatpush.bf16.msra.mxu0 0
  %810 = vmatpush.bf16.msra.mxu0 0
  %811 = vmatpush.bf16.msra.mxu0 0
  %812 = vmatpush.bf16.msra.mxu0 0
  %813 = vmatpush.bf16.msra.mxu0 0
  %814 = vmatpush.bf16.msra.mxu0 0
  %815 = vmatpush.bf16.msra.mxu0 0
  %816 = vmatpush.bf16.msra.mxu0 %v804
  %817 = vmatmul.bf16.gmra.mxu0 %v807
  %v818 = vpop.f32.mrf.mxu0
  %v819 = vadd.f32 0.0, %v818
  %v820 = vpop.f32.mrf.mxu0
  %821 = vdwg.mxu0
  %v824 = vunpack.c.l.b16 %v478
  %v825 = vunpack.c.l.b16 %v479
  %v826 = vpack.c.b16 %v825, %v824
  %v829 = vsel %vm35, %v432, 0
  %831 = vmatpush.bf16.msra.mxu0 0
  %832 = vmatpush.bf16.msra.mxu0 0
  %833 = vmatpush.bf16.msra.mxu0 0
  %834 = vmatpush.bf16.msra.mxu0 0
  %835 = vmatpush.bf16.msra.mxu0 0
  %836 = vmatpush.bf16.msra.mxu0 0
  %837 = vmatpush.bf16.msra.mxu0 0
  %838 = vmatpush.bf16.msra.mxu0 %v826
  %839 = vmatmul.bf16.gmra.mxu0 %v829
  %v840 = vpop.f32.mrf.mxu0
  %v841 = vadd.f32 0.0, %v840
  %v842 = vpop.f32.mrf.mxu0
  %843 = vdwg.mxu0
  %v846 = vunpack.c.l.b16 %v480
  %v847 = vunpack.c.l.b16 %v481
  %v848 = vpack.c.b16 %v847, %v846
  %v851 = vsel %vm35, %v433, 0
  %853 = vmatpush.bf16.msra.mxu0 0
  %854 = vmatpush.bf16.msra.mxu0 0
  %855 = vmatpush.bf16.msra.mxu0 0
  %856 = vmatpush.bf16.msra.mxu0 0
  %857 = vmatpush.bf16.msra.mxu0 0
  %858 = vmatpush.bf16.msra.mxu0 0
  %859 = vmatpush.bf16.msra.mxu0 0
  %860 = vmatpush.bf16.msra.mxu0 %v848
  %861 = vmatmul.bf16.gmra.mxu0 %v851
  %v862 = vpop.f32.mrf.mxu0
  %v863 = vadd.f32 0.0, %v862
  %v864 = vpop.f32.mrf.mxu0
  %865 = vdwg.mxu0
  %v868 = vunpack.c.l.b16 %v482
  %v869 = vunpack.c.l.b16 %v483
  %v870 = vpack.c.b16 %v869, %v868
  %v873 = vsel %vm35, %v434, 0
  %875 = vmatpush.bf16.msra.mxu0 0
  %876 = vmatpush.bf16.msra.mxu0 0
  %877 = vmatpush.bf16.msra.mxu0 0
  %878 = vmatpush.bf16.msra.mxu0 0
  %879 = vmatpush.bf16.msra.mxu0 0
  %880 = vmatpush.bf16.msra.mxu0 0
  %881 = vmatpush.bf16.msra.mxu0 0
  %882 = vmatpush.bf16.msra.mxu0 %v870
  %883 = vmatmul.bf16.gmra.mxu0 %v873
  %v884 = vpop.f32.mrf.mxu0
  %v885 = vadd.f32 0.0, %v884
  %v886 = vpop.f32.mrf.mxu0
  %887 = vdwg.mxu0
  %v890 = vunpack.c.l.b16 %v484
  %v891 = vunpack.c.l.b16 %v485
  %v892 = vpack.c.b16 %v891, %v890
  %v895 = vsel %vm35, %v435, 0
  %897 = vmatpush.bf16.msra.mxu0 0
  %898 = vmatpush.bf16.msra.mxu0 0
  %899 = vmatpush.bf16.msra.mxu0 0
  %900 = vmatpush.bf16.msra.mxu0 0
  %901 = vmatpush.bf16.msra.mxu0 0
  %902 = vmatpush.bf16.msra.mxu0 0
  %903 = vmatpush.bf16.msra.mxu0 0
  %904 = vmatpush.bf16.msra.mxu0 %v892
  %905 = vmatmul.bf16.gmra.mxu0 %v895
  %v906 = vpop.f32.mrf.mxu0
  %v907 = vadd.f32 0.0, %v906
  %v908 = vpop.f32.mrf.mxu0
  %909 = vdwg.mxu0
  %v912 = vunpack.c.l.b16 %v486
  %v913 = vunpack.c.l.b16 %v487
  %v914 = vpack.c.b16 %v913, %v912
  %v917 = vsel %vm35, %v436, 0
  %919 = vmatpush.bf16.msra.mxu0 0
  %920 = vmatpush.bf16.msra.mxu0 0
  %921 = vmatpush.bf16.msra.mxu0 0
  %922 = vmatpush.bf16.msra.mxu0 0
  %923 = vmatpush.bf16.msra.mxu0 0
  %924 = vmatpush.bf16.msra.mxu0 0
  %925 = vmatpush.bf16.msra.mxu0 0
  %926 = vmatpush.bf16.msra.mxu0 %v914
  %927 = vmatmul.bf16.gmra.mxu0 %v917
  %v928 = vpop.f32.mrf.mxu0
  %v929 = vadd.f32 0.0, %v928
  %v930 = vpop.f32.mrf.mxu0
  %931 = vdwg.mxu0
  %v934 = vunpack.c.l.b16 %v488
  %v935 = vunpack.c.l.b16 %v489
  %v936 = vpack.c.b16 %v935, %v934
  %v939 = vsel %vm35, %v437, 0
  %941 = vmatpush.bf16.msra.mxu0 0
  %942 = vmatpush.bf16.msra.mxu0 0
  %943 = vmatpush.bf16.msra.mxu0 0
  %944 = vmatpush.bf16.msra.mxu0 0
  %945 = vmatpush.bf16.msra.mxu0 0
  %946 = vmatpush.bf16.msra.mxu0 0
  %947 = vmatpush.bf16.msra.mxu0 0
  %948 = vmatpush.bf16.msra.mxu0 %v936
  %949 = vmatmul.bf16.gmra.mxu0 %v939
  %v950 = vpop.f32.mrf.mxu0
  %v951 = vadd.f32 0.0, %v950
  %v952 = vpop.f32.mrf.mxu0
  %953 = vdwg.mxu0
  %v956 = vunpack.c.l.b16 %v490
  %v957 = vunpack.c.l.b16 %v491
  %v958 = vpack.c.b16 %v957, %v956
  %v961 = vsel %vm35, %v438, 0
  %963 = vmatpush.bf16.msra.mxu0 0
  %964 = vmatpush.bf16.msra.mxu0 0
  %965 = vmatpush.bf16.msra.mxu0 0
  %966 = vmatpush.bf16.msra.mxu0 0
  %967 = vmatpush.bf16.msra.mxu0 0
  %968 = vmatpush.bf16.msra.mxu0 0
  %969 = vmatpush.bf16.msra.mxu0 0
  %970 = vmatpush.bf16.msra.mxu0 %v958
  %971 = vmatmul.bf16.gmra.mxu0 %v961
  %v972 = vpop.f32.mrf.mxu0
  %v973 = vadd.f32 0.0, %v972
  %v974 = vpop.f32.mrf.mxu0
  %975 = vdwg.mxu0
  %v978 = vunpack.c.l.b16 %v492
  %v979 = vunpack.c.l.b16 %v493
  %v980 = vpack.c.b16 %v979, %v978
  %v983 = vsel %vm35, %v439, 0
  %985 = vmatpush.bf16.msra.mxu0 0
  %986 = vmatpush.bf16.msra.mxu0 0
  %987 = vmatpush.bf16.msra.mxu0 0
  %988 = vmatpush.bf16.msra.mxu0 0
  %989 = vmatpush.bf16.msra.mxu0 0
  %990 = vmatpush.bf16.msra.mxu0 0
  %991 = vmatpush.bf16.msra.mxu0 0
  %992 = vmatpush.bf16.msra.mxu0 %v980
  %993 = vmatmul.bf16.gmra.mxu0 %v983
  %v994 = vpop.f32.mrf.mxu0
  %v995 = vadd.f32 0.0, %v994
  %v996 = vpop.f32.mrf.mxu0
  %997 = vdwg.mxu0
  %v1000 = vunpack.c.l.b16 %v494
  %v1001 = vunpack.c.l.b16 %v495
  %v1002 = vpack.c.b16 %v1001, %v1000
  %v1005 = vsel %vm35, %v440, 0
  %1007 = vmatpush.bf16.msra.mxu0 0
  %1008 = vmatpush.bf16.msra.mxu0 0
  %1009 = vmatpush.bf16.msra.mxu0 0
  %1010 = vmatpush.bf16.msra.mxu0 0
  %1011 = vmatpush.bf16.msra.mxu0 0
  %1012 = vmatpush.bf16.msra.mxu0 0
  %1013 = vmatpush.bf16.msra.mxu0 0
  %1014 = vmatpush.bf16.msra.mxu0 %v1002
  %1015 = vmatmul.bf16.gmra.mxu0 %v1005
  %v1016 = vpop.f32.mrf.mxu0
  %v1017 = vadd.f32 0.0, %v1016
  %v1018 = vpop.f32.mrf.mxu0
  %1019 = vdwg.mxu0
  %v1022 = vunpack.c.l.b16 %v496
  %v1023 = vunpack.c.l.b16 %v497
  %v1024 = vpack.c.b16 %v1023, %v1022
  %v1027 = vsel %vm35, %v441, 0
  %1029 = vmatpush.bf16.msra.mxu0 0
  %1030 = vmatpush.bf16.msra.mxu0 0
  %1031 = vmatpush.bf16.msra.mxu0 0
  %1032 = vmatpush.bf16.msra.mxu0 0
  %1033 = vmatpush.bf16.msra.mxu0 0
  %1034 = vmatpush.bf16.msra.mxu0 0
  %1035 = vmatpush.bf16.msra.mxu0 0
  %1036 = vmatpush.bf16.msra.mxu0 %v1024
  %1037 = vmatmul.bf16.gmra.mxu0 %v1027
  %v1038 = vpop.f32.mrf.mxu0
  %v1039 = vadd.f32 0.0, %v1038
  %v1040 = vpop.f32.mrf.mxu0
  %1041 = vdwg.mxu0
  %v1044 = vunpack.c.l.b16 %v498
  %v1045 = vunpack.c.l.b16 %v499
  %v1046 = vpack.c.b16 %v1045, %v1044
  %v1049 = vsel %vm35, %v442, 0
  %1051 = vmatpush.bf16.msra.mxu0 0
  %1052 = vmatpush.bf16.msra.mxu0 0
  %1053 = vmatpush.bf16.msra.mxu0 0
  %1054 = vmatpush.bf16.msra.mxu0 0
  %1055 = vmatpush.bf16.msra.mxu0 0
  %1056 = vmatpush.bf16.msra.mxu0 0
  %1057 = vmatpush.bf16.msra.mxu0 0
  %1058 = vmatpush.bf16.msra.mxu0 %v1046
  %1059 = vmatmul.bf16.gmra.mxu0 %v1049
  %v1060 = vpop.f32.mrf.mxu0
  %v1061 = vadd.f32 0.0, %v1060
  %v1062 = vpop.f32.mrf.mxu0
  %1063 = vdwg.mxu0
  %v1066 = vunpack.c.l.b16 %v500
  %v1067 = vunpack.c.l.b16 %v501
  %v1068 = vpack.c.b16 %v1067, %v1066
  %v1071 = vsel %vm35, %v443, 0
  %1073 = vmatpush.bf16.msra.mxu0 0
  %1074 = vmatpush.bf16.msra.mxu0 0
  %1075 = vmatpush.bf16.msra.mxu0 0
  %1076 = vmatpush.bf16.msra.mxu0 0
  %1077 = vmatpush.bf16.msra.mxu0 0
  %1078 = vmatpush.bf16.msra.mxu0 0
  %1079 = vmatpush.bf16.msra.mxu0 0
  %1080 = vmatpush.bf16.msra.mxu0 %v1068
  %1081 = vmatmul.bf16.gmra.mxu0 %v1071
  %v1082 = vpop.f32.mrf.mxu0
  %v1083 = vadd.f32 0.0, %v1082
  %v1084 = vpop.f32.mrf.mxu0
  %1085 = vdwg.mxu0
  %v1088 = vunpack.c.l.b16 %v502
  %v1089 = vunpack.c.l.b16 %v503
  %v1090 = vpack.c.b16 %v1089, %v1088
  %v1093 = vsel %vm35, %v444, 0
  %1095 = vmatpush.bf16.msra.mxu0 0
  %1096 = vmatpush.bf16.msra.mxu0 0
  %1097 = vmatpush.bf16.msra.mxu0 0
  %1098 = vmatpush.bf16.msra.mxu0 0
  %1099 = vmatpush.bf16.msra.mxu0 0
  %1100 = vmatpush.bf16.msra.mxu0 0
  %1101 = vmatpush.bf16.msra.mxu0 0
  %1102 = vmatpush.bf16.msra.mxu0 %v1090
  %1103 = vmatmul.bf16.gmra.mxu0 %v1093
  %v1104 = vpop.f32.mrf.mxu0
  %v1105 = vadd.f32 0.0, %v1104
  %v1106 = vpop.f32.mrf.mxu0
  %1107 = vdwg.mxu0
  %v1110 = vunpack.c.l.b16 %v504
  %v1111 = vunpack.c.l.b16 %v505
  %v1112 = vpack.c.b16 %v1111, %v1110
  %v1115 = vsel %vm35, %v445, 0
  %1117 = vmatpush.bf16.msra.mxu0 0
  %1118 = vmatpush.bf16.msra.mxu0 0
  %1119 = vmatpush.bf16.msra.mxu0 0
  %1120 = vmatpush.bf16.msra.mxu0 0
  %1121 = vmatpush.bf16.msra.mxu0 0
  %1122 = vmatpush.bf16.msra.mxu0 0
  %1123 = vmatpush.bf16.msra.mxu0 0
  %1124 = vmatpush.bf16.msra.mxu0 %v1112
  %1125 = vmatmul.bf16.gmra.mxu0 %v1115
  %v1126 = vpop.f32.mrf.mxu0
  %v1127 = vadd.f32 0.0, %v1126
  %v1128 = vpop.f32.mrf.mxu0
  %1129 = vdwg.mxu0
  %v1132 = vunpack.c.l.b16 %v506
  %v1133 = vunpack.c.l.b16 %v507
  %v1134 = vpack.c.b16 %v1133, %v1132
  %v1137 = vsel %vm35, %v446, 0
  %1139 = vmatpush.bf16.msra.mxu0 0
  %1140 = vmatpush.bf16.msra.mxu0 0
  %1141 = vmatpush.bf16.msra.mxu0 0
  %1142 = vmatpush.bf16.msra.mxu0 0
  %1143 = vmatpush.bf16.msra.mxu0 0
  %1144 = vmatpush.bf16.msra.mxu0 0
  %1145 = vmatpush.bf16.msra.mxu0 0
  %1146 = vmatpush.bf16.msra.mxu0 %v1134
  %1147 = vmatmul.bf16.gmra.mxu0 %v1137
  %v1148 = vpop.f32.mrf.mxu0
  %v1149 = vadd.f32 0.0, %v1148
  %v1150 = vpop.f32.mrf.mxu0
  %1151 = vdwg.mxu0
  %v1154 = vunpack.c.l.b16 %v508
  %v1155 = vunpack.c.l.b16 %v509
  %v1156 = vpack.c.b16 %v1155, %v1154
  %v1159 = vsel %vm35, %v447, 0
  %1161 = vmatpush.bf16.msra.mxu0 0
  %1162 = vmatpush.bf16.msra.mxu0 0
  %1163 = vmatpush.bf16.msra.mxu0 0
  %1164 = vmatpush.bf16.msra.mxu0 0
  %1165 = vmatpush.bf16.msra.mxu0 0
  %1166 = vmatpush.bf16.msra.mxu0 0
  %1167 = vmatpush.bf16.msra.mxu0 0
  %1168 = vmatpush.bf16.msra.mxu0 %v1156
  %1169 = vmatmul.bf16.gmra.mxu0 %v1159
  %v1170 = vpop.f32.mrf.mxu0
  %v1171 = vadd.f32 0.0, %v1170
  %v1172 = vpop.f32.mrf.mxu0
  %1173 = vdwg.mxu0
  %v1176 = vunpack.c.l.b16 %v510
  %v1177 = vunpack.c.l.b16 %v511
  %v1178 = vpack.c.b16 %v1177, %v1176
  %v1181 = vsel %vm35, %v448, 0
  %1183 = vmatpush.bf16.msra.mxu0 0
  %1184 = vmatpush.bf16.msra.mxu0 0
  %1185 = vmatpush.bf16.msra.mxu0 0
  %1186 = vmatpush.bf16.msra.mxu0 0
  %1187 = vmatpush.bf16.msra.mxu0 0
  %1188 = vmatpush.bf16.msra.mxu0 0
  %1189 = vmatpush.bf16.msra.mxu0 0
  %1190 = vmatpush.bf16.msra.mxu0 %v1178
  %1191 = vmatmul.bf16.gmra.mxu0 %v1181
  %v1192 = vpop.f32.mrf.mxu0
  %v1193 = vadd.f32 0.0, %v1192
  %v1194 = vpop.f32.mrf.mxu0
  %1195 = vdwg.mxu0
  %v1198 = vunpack.c.l.b16 %v512
  %v1199 = vunpack.c.l.b16 %v513
  %v1200 = vpack.c.b16 %v1199, %v1198
  %v1203 = vsel %vm35, %v449, 0
  %1205 = vmatpush.bf16.msra.mxu0 0
  %1206 = vmatpush.bf16.msra.mxu0 0
  %1207 = vmatpush.bf16.msra.mxu0 0
  %1208 = vmatpush.bf16.msra.mxu0 0
  %1209 = vmatpush.bf16.msra.mxu0 0
  %1210 = vmatpush.bf16.msra.mxu0 0
  %1211 = vmatpush.bf16.msra.mxu0 0
  %1212 = vmatpush.bf16.msra.mxu0 %v1200
  %1213 = vmatmul.bf16.gmra.mxu0 %v1203
  %v1214 = vpop.f32.mrf.mxu0
  %v1215 = vadd.f32 0.0, %v1214
  %v1216 = vpop.f32.mrf.mxu0
  %1217 = vdwg.mxu0
  %v1218 = vrot.slane %v577, 4
  %v1219 = vsel %vm210, %v1218, %v533
  %v1221 = vunpack.c.l.s4 1983009808
  %v1222 = vunpack.c.0.s8 %v1221
  %v1223 = vperm.slane %v1219, %v1222
  %v1224 = vrot.slane %v599, 4
  %v1225 = vsel %vm210, %v1224, %v555
  %v1227 = vunpack.c.l.s4 1983009808
  %v1228 = vunpack.c.0.s8 %v1227
  %v1229 = vperm.slane %v1225, %v1228
  %v1230 = vrot.slane %v665, 4
  %v1231 = vsel %vm210, %v1230, %v621
  %v1233 = vunpack.c.l.s4 1983009808
  %v1234 = vunpack.c.0.s8 %v1233
  %v1235 = vperm.slane %v1231, %v1234
  %v1236 = vrot.slane %v687, 4
  %v1237 = vsel %vm210, %v1236, %v643
  %v1239 = vunpack.c.l.s4 1983009808
  %v1240 = vunpack.c.0.s8 %v1239
  %v1241 = vperm.slane %v1237, %v1240
  %v1242 = vrot.slane %v1229, 4
  %v1243 = vsel %vm210, %v1242, %v1223
  %v1245 = vunpack.c.l.s4 1934713408
  %v1246 = vunpack.c.0.s8 %v1245
  %v1247 = vperm.slane %v1243, %v1246
  %v1248 = vrot.slane %v1241, 4
  %v1249 = vsel %vm210, %v1248, %v1235
  %v1251 = vunpack.c.l.s4 1934713408
  %v1252 = vunpack.c.0.s8 %v1251
  %v1253 = vperm.slane %v1249, %v1252
  %v1254 = vrot.slane %v1253, 4
  %v1255 = vsel %vm210, %v1254, %v1247
  %v1256 = vrot.slane %v1247, 4
  %v1257 = vsel %vm210, %v1253, %v1256
  %v1258 = vrot.slane %v753, 4
  %v1259 = vsel %vm210, %v1258, %v709
  %v1261 = vunpack.c.l.s4 1983009808
  %v1262 = vunpack.c.0.s8 %v1261
  %v1263 = vperm.slane %v1259, %v1262
  %v1264 = vrot.slane %v775, 4
  %v1265 = vsel %vm210, %v1264, %v731
  %v1267 = vunpack.c.l.s4 1983009808
  %v1268 = vunpack.c.0.s8 %v1267
  %v1269 = vperm.slane %v1265, %v1268
  %v1270 = vrot.slane %v841, 4
  %v1271 = vsel %vm210, %v1270, %v797
  %v1273 = vunpack.c.l.s4 1983009808
  %v1274 = vunpack.c.0.s8 %v1273
  %v1275 = vperm.slane %v1271, %v1274
  %v1276 = vrot.slane %v863, 4
  %v1277 = vsel %vm210, %v1276, %v819
  %v1279 = vunpack.c.l.s4 1983009808
  %v1280 = vunpack.c.0.s8 %v1279
  %v1281 = vperm.slane %v1277, %v1280
  %v1282 = vrot.slane %v1269, 4
  %v1283 = vsel %vm210, %v1282, %v1263
  %v1285 = vunpack.c.l.s4 1934713408
  %v1286 = vunpack.c.0.s8 %v1285
  %v1287 = vperm.slane %v1283, %v1286
  %v1288 = vrot.slane %v1281, 4
  %v1289 = vsel %vm210, %v1288, %v1275
  %v1291 = vunpack.c.l.s4 1934713408
  %v1292 = vunpack.c.0.s8 %v1291
  %v1293 = vperm.slane %v1289, %v1292
  %v1294 = vrot.slane %v1293, 4
  %v1295 = vsel %vm210, %v1294, %v1287
  %v1296 = vrot.slane %v1287, 4
  %v1297 = vsel %vm210, %v1293, %v1296
  %v1298 = vrot.slane %v929, 4
  %v1299 = vsel %vm210, %v1298, %v885
  %v1301 = vunpack.c.l.s4 1983009808
  %v1302 = vunpack.c.0.s8 %v1301
  %v1303 = vperm.slane %v1299, %v1302
  %v1304 = vrot.slane %v951, 4
  %v1305 = vsel %vm210, %v1304, %v907
  %v1307 = vunpack.c.l.s4 1983009808
  %v1308 = vunpack.c.0.s8 %v1307
  %v1309 = vperm.slane %v1305, %v1308
  %v1310 = vrot.slane %v1017, 4
  %v1311 = vsel %vm210, %v1310, %v973
  %v1313 = vunpack.c.l.s4 1983009808
  %v1314 = vunpack.c.0.s8 %v1313
  %v1315 = vperm.slane %v1311, %v1314
  %v1316 = vrot.slane %v1039, 4
  %v1317 = vsel %vm210, %v1316, %v995
  %v1319 = vunpack.c.l.s4 1983009808
  %v1320 = vunpack.c.0.s8 %v1319
  %v1321 = vperm.slane %v1317, %v1320
  %v1322 = vrot.slane %v1309, 4
  %v1323 = vsel %vm210, %v1322, %v1303
  %v1325 = vunpack.c.l.s4 1934713408
  %v1326 = vunpack.c.0.s8 %v1325
  %v1327 = vperm.slane %v1323, %v1326
  %v1328 = vrot.slane %v1321, 4
  %v1329 = vsel %vm210, %v1328, %v1315
  %v1331 = vunpack.c.l.s4 1934713408
  %v1332 = vunpack.c.0.s8 %v1331
  %v1333 = vperm.slane %v1329, %v1332
  %v1334 = vrot.slane %v1333, 4
  %v1335 = vsel %vm210, %v1334, %v1327
  %v1336 = vrot.slane %v1327, 4
  %v1337 = vsel %vm210, %v1333, %v1336
  %v1338 = vrot.slane %v1105, 4
  %v1339 = vsel %vm210, %v1338, %v1061
  %v1341 = vunpack.c.l.s4 1983009808
  %v1342 = vunpack.c.0.s8 %v1341
  %v1343 = vperm.slane %v1339, %v1342
  %v1344 = vrot.slane %v1127, 4
  %v1345 = vsel %vm210, %v1344, %v1083
  %v1347 = vunpack.c.l.s4 1983009808
  %v1348 = vunpack.c.0.s8 %v1347
  %v1349 = vperm.slane %v1345, %v1348
  %v1350 = vrot.slane %v1193, 4
  %v1351 = vsel %vm210, %v1350, %v1149
  %v1353 = vunpack.c.l.s4 1983009808
  %v1354 = vunpack.c.0.s8 %v1353
  %v1355 = vperm.slane %v1351, %v1354
  %v1356 = vrot.slane %v1215, 4
  %v1357 = vsel %vm210, %v1356, %v1171
  %v1359 = vunpack.c.l.s4 1983009808
  %v1360 = vunpack.c.0.s8 %v1359
  %v1361 = vperm.slane %v1357, %v1360
  %v1362 = vrot.slane %v1349, 4
  %v1363 = vsel %vm210, %v1362, %v1343
  %v1365 = vunpack.c.l.s4 1934713408
  %v1366 = vunpack.c.0.s8 %v1365
  %v1367 = vperm.slane %v1363, %v1366
  %v1368 = vrot.slane %v1361, 4
  %v1369 = vsel %vm210, %v1368, %v1355
  %v1371 = vunpack.c.l.s4 1934713408
  %v1372 = vunpack.c.0.s8 %v1371
  %v1373 = vperm.slane %v1369, %v1372
  %v1374 = vrot.slane %v1373, 4
  %v1375 = vsel %vm210, %v1374, %v1367
  %v1376 = vrot.slane %v1367, 4
  %v1377 = vsel %vm210, %v1373, %v1376
  %v1378 = vmul.f32 %v1255, 0.5
  %v1379 = vmul.f32 %v1295, 0.5
  %v1380 = vmul.f32 %v1335, 0.5
  %v1381 = vmul.f32 %v1375, 0.5
  %v1382 = vmul.f32 %v1257, 0.5
  %v1383 = vmul.f32 %v1297, 0.5
  %v1384 = vmul.f32 %v1337, 0.5
  %v1385 = vmul.f32 %v1377, 0.5
  %v1386 = vmul.f32 %v1255, 0.70710677
  %v1387 = vmul.f32 %v1295, 0.70710677
  %v1388 = vmul.f32 %v1335, 0.70710677
  %v1389 = vmul.f32 %v1375, 0.70710677
  %v1390 = vmul.f32 %v1257, 0.70710677
  %v1391 = vmul.f32 %v1297, 0.70710677
  %v1392 = vmul.f32 %v1337, 0.70710677
  %v1393 = vmul.f32 %v1377, 0.70710677
  %v1394 = vmul.f32 %v1386, %v1386
  %v1395 = vmin.f32 16.0, %v1394
  %v1396 = vmul.f32 %v1395, 2.1237322e-06
  %v1397 = vadd.f32 %v1396, 0.00028619796
  %v1398 = vmul.f32 %v1395, %v1397
  %v1399 = vadd.f32 %v1398, 0.0036580483
  %v1400 = vmul.f32 %v1395, %v1399
  %v1401 = vadd.f32 %v1400, 0.05243302
  %v1402 = vmul.f32 %v1395, %v1401
  %v1403 = vadd.f32 %v1402, 0.18741608
  %v1404 = vmul.f32 %v1395, %v1403
  %v1405 = vadd.f32 %v1404, 1.1283791
  %v1406 = vmul.f32 %v1386, %v1405
  %v1407 = vmul.f32 %v1395, 3.8918573e-05
  %v1408 = vadd.f32 %v1407, 0.001143296
  %v1409 = vmul.f32 %v1395, %v1408
  %v1410 = vadd.f32 %v1409, 0.014752088
  %v1411 = vmul.f32 %v1395, %v1410
  %v1412 = vadd.f32 %v1411, 0.112945676
  %v1413 = vmul.f32 %v1395, %v1412
  %v1414 = vadd.f32 %v1413, 0.4994258
  %v1415 = vmul.f32 %v1395, %v1414
  %v1416 = vadd.f32 %v1415, 1.0
  %v1417 = vrcp.pop %v1416
  %v1418 = vmul.f32 %v1416, %v1417
  %v1419 = vsub.f32 1.0, %v1418
  %v1420 = vmul.f32 %v1417, %v1419
  %v1421 = vadd.f32 %v1417, %v1420
  %vm1422 = vweird.f32 %v1416
  %vm1423 = vweird.f32 %v1417
  %vm1424 = vmor %vm1422, %vm1423
  %v1425 = vsel %vm1424, %v1417, %v1421
  %v1426 = vand.u32 2147483647, %v1416
  %vm1427 = vcmp.eq.f32.partialorder %v1426, 8.507059e+37
  %v1428 = vand.u32 %v1416, 2147483648
  %v1429 = vor.u32 1.1754944e-38, %v1428
  %v1430 = vsel %vm1427, %v1429, %v1425
  %v1431 = vmul.f32 %v1406, %v1430
  %v1432 = vmin.f32 %v1431, 1.0
  %v1433 = vmax.f32 %v1432, -1.0
  %v1434 = vmul.f32 %v1387, %v1387
  %v1435 = vmin.f32 16.0, %v1434
  %v1436 = vmul.f32 %v1435, 2.1237322e-06
  %v1437 = vadd.f32 %v1436, 0.00028619796
  %v1438 = vmul.f32 %v1435, %v1437
  %v1439 = vadd.f32 %v1438, 0.0036580483
  %v1440 = vmul.f32 %v1435, %v1439
  %v1441 = vadd.f32 %v1440, 0.05243302
  %v1442 = vmul.f32 %v1435, %v1441
  %v1443 = vadd.f32 %v1442, 0.18741608
  %v1444 = vmul.f32 %v1435, %v1443
  %v1445 = vadd.f32 %v1444, 1.1283791
  %v1446 = vmul.f32 %v1387, %v1445
  %v1447 = vmul.f32 %v1435, 3.8918573e-05
  %v1448 = vadd.f32 %v1447, 0.001143296
  %v1449 = vmul.f32 %v1435, %v1448
  %v1450 = vadd.f32 %v1449, 0.014752088
  %v1451 = vmul.f32 %v1435, %v1450
  %v1452 = vadd.f32 %v1451, 0.112945676
  %v1453 = vmul.f32 %v1435, %v1452
  %v1454 = vadd.f32 %v1453, 0.4994258
  %v1455 = vmul.f32 %v1435, %v1454
  %v1456 = vadd.f32 %v1455, 1.0
  %v1457 = vrcp.pop %v1456
  %v1458 = vmul.f32 %v1456, %v1457
  %v1459 = vsub.f32 1.0, %v1458
  %v1460 = vmul.f32 %v1457, %v1459
  %v1461 = vadd.f32 %v1457, %v1460
  %vm1462 = vweird.f32 %v1456
  %vm1463 = vweird.f32 %v1457
  %vm1464 = vmor %vm1462, %vm1463
  %v1465 = vsel %vm1464, %v1457, %v1461
  %v1466 = vand.u32 2147483647, %v1456
  %vm1467 = vcmp.eq.f32.partialorder %v1466, 8.507059e+37
  %v1468 = vand.u32 %v1456, 2147483648
  %v1469 = vor.u32 1.1754944e-38, %v1468
  %v1470 = vsel %vm1467, %v1469, %v1465
  %v1471 = vmul.f32 %v1446, %v1470
  %v1472 = vmin.f32 %v1471, 1.0
  %v1473 = vmax.f32 %v1472, -1.0
  %v1474 = vmul.f32 %v1388, %v1388
  %v1475 = vmin.f32 16.0, %v1474
  %v1476 = vmul.f32 %v1475, 2.1237322e-06
  %v1477 = vadd.f32 %v1476, 0.00028619796
  %v1478 = vmul.f32 %v1475, %v1477
  %v1479 = vadd.f32 %v1478, 0.0036580483
  %v1480 = vmul.f32 %v1475, %v1479
  %v1481 = vadd.f32 %v1480, 0.05243302
  %v1482 = vmul.f32 %v1475, %v1481
  %v1483 = vadd.f32 %v1482, 0.18741608
  %v1484 = vmul.f32 %v1475, %v1483
  %v1485 = vadd.f32 %v1484, 1.1283791
  %v1486 = vmul.f32 %v1388, %v1485
  %v1487 = vmul.f32 %v1475, 3.8918573e-05
  %v1488 = vadd.f32 %v1487, 0.001143296
  %v1489 = vmul.f32 %v1475, %v1488
  %v1490 = vadd.f32 %v1489, 0.014752088
  %v1491 = vmul.f32 %v1475, %v1490
  %v1492 = vadd.f32 %v1491, 0.112945676
  %v1493 = vmul.f32 %v1475, %v1492
  %v1494 = vadd.f32 %v1493, 0.4994258
  %v1495 = vmul.f32 %v1475, %v1494
  %v1496 = vadd.f32 %v1495, 1.0
  %v1497 = vrcp.pop %v1496
  %v1498 = vmul.f32 %v1496, %v1497
  %v1499 = vsub.f32 1.0, %v1498
  %v1500 = vmul.f32 %v1497, %v1499
  %v1501 = vadd.f32 %v1497, %v1500
  %vm1502 = vweird.f32 %v1496
  %vm1503 = vweird.f32 %v1497
  %vm1504 = vmor %vm1502, %vm1503
  %v1505 = vsel %vm1504, %v1497, %v1501
  %v1506 = vand.u32 2147483647, %v1496
  %vm1507 = vcmp.eq.f32.partialorder %v1506, 8.507059e+37
  %v1508 = vand.u32 %v1496, 2147483648
  %v1509 = vor.u32 1.1754944e-38, %v1508
  %v1510 = vsel %vm1507, %v1509, %v1505
  %v1511 = vmul.f32 %v1486, %v1510
  %v1512 = vmin.f32 %v1511, 1.0
  %v1513 = vmax.f32 %v1512, -1.0
  %v1514 = vmul.f32 %v1389, %v1389
  %v1515 = vmin.f32 16.0, %v1514
  %v1516 = vmul.f32 %v1515, 2.1237322e-06
  %v1517 = vadd.f32 %v1516, 0.00028619796
  %v1518 = vmul.f32 %v1515, %v1517
  %v1519 = vadd.f32 %v1518, 0.0036580483
  %v1520 = vmul.f32 %v1515, %v1519
  %v1521 = vadd.f32 %v1520, 0.05243302
  %v1522 = vmul.f32 %v1515, %v1521
  %v1523 = vadd.f32 %v1522, 0.18741608
  %v1524 = vmul.f32 %v1515, %v1523
  %v1525 = vadd.f32 %v1524, 1.1283791
  %v1526 = vmul.f32 %v1389, %v1525
  %v1527 = vmul.f32 %v1515, 3.8918573e-05
  %v1528 = vadd.f32 %v1527, 0.001143296
  %v1529 = vmul.f32 %v1515, %v1528
  %v1530 = vadd.f32 %v1529, 0.014752088
  %v1531 = vmul.f32 %v1515, %v1530
  %v1532 = vadd.f32 %v1531, 0.112945676
  %v1533 = vmul.f32 %v1515, %v1532
  %v1534 = vadd.f32 %v1533, 0.4994258
  %v1535 = vmul.f32 %v1515, %v1534
  %v1536 = vadd.f32 %v1535, 1.0
  %v1537 = vrcp.pop %v1536
  %v1538 = vmul.f32 %v1536, %v1537
  %v1539 = vsub.f32 1.0, %v1538
  %v1540 = vmul.f32 %v1537, %v1539
  %v1541 = vadd.f32 %v1537, %v1540
  %vm1542 = vweird.f32 %v1536
  %vm1543 = vweird.f32 %v1537
  %vm1544 = vmor %vm1542, %vm1543
  %v1545 = vsel %vm1544, %v1537, %v1541
  %v1546 = vand.u32 2147483647, %v1536
  %vm1547 = vcmp.eq.f32.partialorder %v1546, 8.507059e+37
  %v1548 = vand.u32 %v1536, 2147483648
  %v1549 = vor.u32 1.1754944e-38, %v1548
  %v1550 = vsel %vm1547, %v1549, %v1545
  %v1551 = vmul.f32 %v1526, %v1550
  %v1552 = vmin.f32 %v1551, 1.0
  %v1553 = vmax.f32 %v1552, -1.0
  %v1554 = vmul.f32 %v1390, %v1390
  %v1555 = vmin.f32 16.0, %v1554
  %v1556 = vmul.f32 %v1555, 2.1237322e-06
  %v1557 = vadd.f32 %v1556, 0.00028619796
  %v1558 = vmul.f32 %v1555, %v1557
  %v1559 = vadd.f32 %v1558, 0.0036580483
  %v1560 = vmul.f32 %v1555, %v1559
  %v1561 = vadd.f32 %v1560, 0.05243302
  %v1562 = vmul.f32 %v1555, %v1561
  %v1563 = vadd.f32 %v1562, 0.18741608
  %v1564 = vmul.f32 %v1555, %v1563
  %v1565 = vadd.f32 %v1564, 1.1283791
  %v1566 = vmul.f32 %v1390, %v1565
  %v1567 = vmul.f32 %v1555, 3.8918573e-05
  %v1568 = vadd.f32 %v1567, 0.001143296
  %v1569 = vmul.f32 %v1555, %v1568
  %v1570 = vadd.f32 %v1569, 0.014752088
  %v1571 = vmul.f32 %v1555, %v1570
  %v1572 = vadd.f32 %v1571, 0.112945676
  %v1573 = vmul.f32 %v1555, %v1572
  %v1574 = vadd.f32 %v1573, 0.4994258
  %v1575 = vmul.f32 %v1555, %v1574
  %v1576 = vadd.f32 %v1575, 1.0
  %v1577 = vrcp.pop %v1576
  %v1578 = vmul.f32 %v1576, %v1577
  %v1579 = vsub.f32 1.0, %v1578
  %v1580 = vmul.f32 %v1577, %v1579
  %v1581 = vadd.f32 %v1577, %v1580
  %vm1582 = vweird.f32 %v1576
  %vm1583 = vweird.f32 %v1577
  %vm1584 = vmor %vm1582, %vm1583
  %v1585 = vsel %vm1584, %v1577, %v1581
  %v1586 = vand.u32 2147483647, %v1576
  %vm1587 = vcmp.eq.f32.partialorder %v1586, 8.507059e+37
  %v1588 = vand.u32 %v1576, 2147483648
  %v1589 = vor.u32 1.1754944e-38, %v1588
  %v1590 = vsel %vm1587, %v1589, %v1585
  %v1591 = vmul.f32 %v1566, %v1590
  %v1592 = vmin.f32 %v1591, 1.0
  %v1593 = vmax.f32 %v1592, -1.0
  %v1594 = vmul.f32 %v1391, %v1391
  %v1595 = vmin.f32 16.0, %v1594
  %v1596 = vmul.f32 %v1595, 2.1237322e-06
  %v1597 = vadd.f32 %v1596, 0.00028619796
  %v1598 = vmul.f32 %v1595, %v1597
  %v1599 = vadd.f32 %v1598, 0.0036580483
  %v1600 = vmul.f32 %v1595, %v1599
  %v1601 = vadd.f32 %v1600, 0.05243302
  %v1602 = vmul.f32 %v1595, %v1601
  %v1603 = vadd.f32 %v1602, 0.18741608
  %v1604 = vmul.f32 %v1595, %v1603
  %v1605 = vadd.f32 %v1604, 1.1283791
  %v1606 = vmul.f32 %v1391, %v1605
  %v1607 = vmul.f32 %v1595, 3.8918573e-05
  %v1608 = vadd.f32 %v1607, 0.001143296
  %v1609 = vmul.f32 %v1595, %v1608
  %v1610 = vadd.f32 %v1609, 0.014752088
  %v1611 = vmul.f32 %v1595, %v1610
  %v1612 = vadd.f32 %v1611, 0.112945676
  %v1613 = vmul.f32 %v1595, %v1612
  %v1614 = vadd.f32 %v1613, 0.4994258
  %v1615 = vmul.f32 %v1595, %v1614
  %v1616 = vadd.f32 %v1615, 1.0
  %v1617 = vrcp.pop %v1616
  %v1618 = vmul.f32 %v1616, %v1617
  %v1619 = vsub.f32 1.0, %v1618
  %v1620 = vmul.f32 %v1617, %v1619
  %v1621 = vadd.f32 %v1617, %v1620
  %vm1622 = vweird.f32 %v1616
  %vm1623 = vweird.f32 %v1617
  %vm1624 = vmor %vm1622, %vm1623
  %v1625 = vsel %vm1624, %v1617, %v1621
  %v1626 = vand.u32 2147483647, %v1616
  %vm1627 = vcmp.eq.f32.partialorder %v1626, 8.507059e+37
  %v1628 = vand.u32 %v1616, 2147483648
  %v1629 = vor.u32 1.1754944e-38, %v1628
  %v1630 = vsel %vm1627, %v1629, %v1625
  %v1631 = vmul.f32 %v1606, %v1630
  %v1632 = vmin.f32 %v1631, 1.0
  %v1633 = vmax.f32 %v1632, -1.0
  %v1634 = vmul.f32 %v1392, %v1392
  %v1635 = vmin.f32 16.0, %v1634
  %v1636 = vmul.f32 %v1635, 2.1237322e-06
  %v1637 = vadd.f32 %v1636, 0.00028619796
  %v1638 = vmul.f32 %v1635, %v1637
  %v1639 = vadd.f32 %v1638, 0.0036580483
  %v1640 = vmul.f32 %v1635, %v1639
  %v1641 = vadd.f32 %v1640, 0.05243302
  %v1642 = vmul.f32 %v1635, %v1641
  %v1643 = vadd.f32 %v1642, 0.18741608
  %v1644 = vmul.f32 %v1635, %v1643
  %v1645 = vadd.f32 %v1644, 1.1283791
  %v1646 = vmul.f32 %v1392, %v1645
  %v1647 = vmul.f32 %v1635, 3.8918573e-05
  %v1648 = vadd.f32 %v1647, 0.001143296
  %v1649 = vmul.f32 %v1635, %v1648
  %v1650 = vadd.f32 %v1649, 0.014752088
  %v1651 = vmul.f32 %v1635, %v1650
  %v1652 = vadd.f32 %v1651, 0.112945676
  %v1653 = vmul.f32 %v1635, %v1652
  %v1654 = vadd.f32 %v1653, 0.4994258
  %v1655 = vmul.f32 %v1635, %v1654
  %v1656 = vadd.f32 %v1655, 1.0
  %v1657 = vrcp.pop %v1656
  %v1658 = vmul.f32 %v1656, %v1657
  %v1659 = vsub.f32 1.0, %v1658
  %v1660 = vmul.f32 %v1657, %v1659
  %v1661 = vadd.f32 %v1657, %v1660
  %vm1662 = vweird.f32 %v1656
  %vm1663 = vweird.f32 %v1657
  %vm1664 = vmor %vm1662, %vm1663
  %v1665 = vsel %vm1664, %v1657, %v1661
  %v1666 = vand.u32 2147483647, %v1656
  %vm1667 = vcmp.eq.f32.partialorder %v1666, 8.507059e+37
  %v1668 = vand.u32 %v1656, 2147483648
  %v1669 = vor.u32 1.1754944e-38, %v1668
  %v1670 = vsel %vm1667, %v1669, %v1665
  %v1671 = vmul.f32 %v1646, %v1670
  %v1672 = vmin.f32 %v1671, 1.0
  %v1673 = vmax.f32 %v1672, -1.0
  %v1674 = vmul.f32 %v1393, %v1393
  %v1675 = vmin.f32 16.0, %v1674
  %v1676 = vmul.f32 %v1675, 2.1237322e-06
  %v1677 = vadd.f32 %v1676, 0.00028619796
  %v1678 = vmul.f32 %v1675, %v1677
  %v1679 = vadd.f32 %v1678, 0.0036580483
  %v1680 = vmul.f32 %v1675, %v1679
  %v1681 = vadd.f32 %v1680, 0.05243302
  %v1682 = vmul.f32 %v1675, %v1681
  %v1683 = vadd.f32 %v1682, 0.18741608
  %v1684 = vmul.f32 %v1675, %v1683
  %v1685 = vadd.f32 %v1684, 1.1283791
  %v1686 = vmul.f32 %v1393, %v1685
  %v1687 = vmul.f32 %v1675, 3.8918573e-05
  %v1688 = vadd.f32 %v1687, 0.001143296
  %v1689 = vmul.f32 %v1675, %v1688
  %v1690 = vadd.f32 %v1689, 0.014752088
  %v1691 = vmul.f32 %v1675, %v1690
  %v1692 = vadd.f32 %v1691, 0.112945676
  %v1693 = vmul.f32 %v1675, %v1692
  %v1694 = vadd.f32 %v1693, 0.4994258
  %v1695 = vmul.f32 %v1675, %v1694
  %v1696 = vadd.f32 %v1695, 1.0
  %v1697 = vrcp.pop %v1696
  %v1698 = vmul.f32 %v1696, %v1697
  %v1699 = vsub.f32 1.0, %v1698
  %v1700 = vmul.f32 %v1697, %v1699
  %v1701 = vadd.f32 %v1697, %v1700
  %vm1702 = vweird.f32 %v1696
  %vm1703 = vweird.f32 %v1697
  %vm1704 = vmor %vm1702, %vm1703
  %v1705 = vsel %vm1704, %v1697, %v1701
  %v1706 = vand.u32 2147483647, %v1696
  %vm1707 = vcmp.eq.f32.partialorder %v1706, 8.507059e+37
  %v1708 = vand.u32 %v1696, 2147483648
  %v1709 = vor.u32 1.1754944e-38, %v1708
  %v1710 = vsel %vm1707, %v1709, %v1705
  %v1711 = vmul.f32 %v1686, %v1710
  %v1712 = vmin.f32 %v1711, 1.0
  %v1713 = vmax.f32 %v1712, -1.0
  %v1714 = vadd.f32 %v1433, 1.0
  %v1715 = vadd.f32 %v1473, 1.0
  %v1716 = vadd.f32 %v1513, 1.0
  %v1717 = vadd.f32 %v1553, 1.0
  %v1718 = vadd.f32 %v1593, 1.0
  %v1719 = vadd.f32 %v1633, 1.0
  %v1720 = vadd.f32 %v1673, 1.0
  %v1721 = vadd.f32 %v1713, 1.0
  %v1722 = vmul.f32 %v1378, %v1714
  %v1723 = vmul.f32 %v1379, %v1715
  %v1724 = vmul.f32 %v1380, %v1716
  %v1725 = vmul.f32 %v1381, %v1717
  %v1726 = vmul.f32 %v1382, %v1718
  %v1727 = vmul.f32 %v1383, %v1719
  %v1728 = vmul.f32 %v1384, %v1720
  %v1729 = vmul.f32 %v1385, %v1721
  %1730 = vxpose.xlu0.b32.start [1/16] %v1722, 128
  %1731 = vxpose.xlu0.b32.cont [2/16] %v1723, 128
  %1732 = vxpose.xlu0.b32.cont [3/16] %v1724, 128
  %1733 = vxpose.xlu0.b32.cont [4/16] %v1725, 128
  %1734 = vxpose.xlu0.b32.cont [5/16] 0.0, 128
  %1735 = vxpose.xlu0.b32.cont [6/16] 0.0, 128
  %1736 = vxpose.xlu0.b32.cont [7/16] 0.0, 128
  %1737 = vxpose.xlu0.b32.cont [8/16] 0.0, 128
  %1738 = vxpose.xlu0.b32.cont [9/16] 0.0, 128
  %1739 = vxpose.xlu0.b32.cont [10/16] 0.0, 128
  %1740 = vxpose.xlu0.b32.cont [11/16] 0.0, 128
  %1741 = vxpose.xlu0.b32.cont [12/16] 0.0, 128
  %1742 = vxpose.xlu0.b32.cont [13/16] 0.0, 128
  %1743 = vxpose.xlu0.b32.cont [14/16] 0.0, 128
  %1744 = vxpose.xlu0.b32.cont [15/16] 0.0, 128
  %1745 = vxpose.xlu0.b32.end [16/16] 0.0, 128
  %v1746 = vpop.trf.xlu0
  %v1747 = vpop.trf.xlu0
  %v1748 = vpop.trf.xlu0
  %v1749 = vpop.trf.xlu0
  %v1750 = vpop.trf.xlu0
  %v1751 = vpop.trf.xlu0
  %v1752 = vpop.trf.xlu0
  %v1753 = vpop.trf.xlu0
  %v1754 = vpop.trf.xlu0
  %v1755 = vpop.trf.xlu0
  %v1756 = vpop.trf.xlu0
  %v1757 = vpop.trf.xlu0
  %v1758 = vpop.trf.xlu0
  %v1759 = vpop.trf.xlu0
  %v1760 = vpop.trf.xlu0
  %v1761 = vpop.trf.xlu0
  %1762 = vxpose.xlu0.b32.start [1/16] %v1726, 128
  %1763 = vxpose.xlu0.b32.cont [2/16] %v1727, 128
  %1764 = vxpose.xlu0.b32.cont [3/16] %v1728, 128
  %1765 = vxpose.xlu0.b32.cont [4/16] %v1729, 128
  %1766 = vxpose.xlu0.b32.cont [5/16] 0.0, 128
  %1767 = vxpose.xlu0.b32.cont [6/16] 0.0, 128
  %1768 = vxpose.xlu0.b32.cont [7/16] 0.0, 128
  %1769 = vxpose.xlu0.b32.cont [8/16] 0.0, 128
  %1770 = vxpose.xlu0.b32.cont [9/16] 0.0, 128
  %1771 = vxpose.xlu0.b32.cont [10/16] 0.0, 128
  %1772 = vxpose.xlu0.b32.cont [11/16] 0.0, 128
  %1773 = vxpose.xlu0.b32.cont [12/16] 0.0, 128
  %1774 = vxpose.xlu0.b32.cont [13/16] 0.0, 128
  %1775 = vxpose.xlu0.b32.cont [14/16] 0.0, 128
  %1776 = vxpose.xlu0.b32.cont [15/16] 0.0, 128
  %1777 = vxpose.xlu0.b32.end [16/16] 0.0, 128
  %v1778 = vpop.trf.xlu0
  %v1779 = vpop.trf.xlu0
  %v1780 = vpop.trf.xlu0
  %v1781 = vpop.trf.xlu0
  %v1782 = vpop.trf.xlu0
  %v1783 = vpop.trf.xlu0
  %v1784 = vpop.trf.xlu0
  %v1785 = vpop.trf.xlu0
  %v1786 = vpop.trf.xlu0
  %v1787 = vpop.trf.xlu0
  %v1788 = vpop.trf.xlu0
  %v1789 = vpop.trf.xlu0
  %v1790 = vpop.trf.xlu0
  %v1791 = vpop.trf.xlu0
  %v1792 = vpop.trf.xlu0
  %v1793 = vpop.trf.xlu0
  %v1794 = vpack.c.bf16 %v1747, %v1746
  %v1795 = vpack.c.bf16 %v1779, %v1778
  %v1796 = vld [vmem:[%s5] sm:$0xf]
  %v1797 = vld [vmem:[%s5 + $0x4] sm:$0xf]
  %v1798 = vld [vmem:[%s5 + $0x8] sm:$0xf]
  %v1799 = vld [vmem:[%s5 + $0xc] sm:$0xf]
  %v1800 = vld [vmem:[%s6] sm:$0x1]
  %v1802 = vperm.slane %v1800, 0
  %v1808 = vunpack.c.l.b16 %v1796
  %v1809 = vunpack.c.l.b16 %v1797
  %v1810 = vunpack.c.l.b16 %v1798
  %v1811 = vunpack.c.l.b16 %v1799
  %v1812 = vpack.c.b16 %v1809, %v1808
  %v1813 = vpack.c.b16 %v1811, %v1810
  %vm1816 = vcmask 261120
  %v1818 = vsel %vm1816, %v1794, 0
  %v1821 = vsel %vm1816, %v1795, 0
  %1823 = vmatpush.bf16.msra.mxu0 0
  %1824 = vmatpush.bf16.msra.mxu0 0
  %1825 = vmatpush.bf16.msra.mxu0 0
  %1826 = vmatpush.bf16.msra.mxu0 0
  %1827 = vmatpush.bf16.msra.mxu0 0
  %1828 = vmatpush.bf16.msra.mxu0 0
  %1829 = vmatpush.bf16.msra.mxu0 %v1813
  %1830 = vmatpush.bf16.msra.mxu0 %v1812
  %1831 = vmatmul.bf16.gmra.mxu0 %v1818
  %v1832 = vpop.f32.mrf.mxu0
  %v1833 = vadd.f32 %v1802, %v1832
  %v1834 = vpop.f32.mrf.mxu0
  %v1835 = vadd.f32 %v1802, %v1834
  %1836 = vmatmul.bf16.gmra.mxu0 %v1821
  %v1837 = vpop.f32.mrf.mxu0
  %v1838 = vadd.f32 %v1802, %v1837
  %v1839 = vpop.f32.mrf.mxu0
  %v1840 = vadd.f32 %v1802, %v1839
  %1841 = vdwg.mxu0
  %v1842 = vld [vmem:[%s1] sm:$0xff]
  %v1843 = vld [vmem:[%s1 + $0x8] sm:$0xff]
  %v1844 = vld [vmem:[%s1 + $0x10] sm:$0xff]
  %v1845 = vld [vmem:[%s1 + $0x18] sm:$0xff]
  %v1846 = vld [vmem:[%s1 + $0x20] sm:$0xff]
  %v1847 = vld [vmem:[%s1 + $0x28] sm:$0xff]
  %v1848 = vld [vmem:[%s1 + $0x30] sm:$0xff]
  %v1849 = vld [vmem:[%s1 + $0x38] sm:$0xff]
  %1850 = vxpose.xlu0.b32.start [1/16] %v1842, 128
  %1851 = vxpose.xlu0.b32.cont [2/16] %v1843, 128
  %1852 = vxpose.xlu0.b32.cont [3/16] %v1844, 128
  %1853 = vxpose.xlu0.b32.cont [4/16] %v1845, 128
  %1854 = vxpose.xlu0.b32.cont [5/16] 0.0, 128
  %1855 = vxpose.xlu0.b32.cont [6/16] 0.0, 128
  %1856 = vxpose.xlu0.b32.cont [7/16] 0.0, 128
  %1857 = vxpose.xlu0.b32.cont [8/16] 0.0, 128
  %1858 = vxpose.xlu0.b32.cont [9/16] 0.0, 128
  %1859 = vxpose.xlu0.b32.cont [10/16] 0.0, 128
  %1860 = vxpose.xlu0.b32.cont [11/16] 0.0, 128
  %1861 = vxpose.xlu0.b32.cont [12/16] 0.0, 128
  %1862 = vxpose.xlu0.b32.cont [13/16] 0.0, 128
  %1863 = vxpose.xlu0.b32.cont [14/16] 0.0, 128
  %1864 = vxpose.xlu0.b32.cont [15/16] 0.0, 128
  %1865 = vxpose.xlu0.b32.end [16/16] 0.0, 128
  %v1866 = vpop.trf.xlu0
  %v1867 = vpop.trf.xlu0
  %v1868 = vpop.trf.xlu0
  %v1869 = vpop.trf.xlu0
  %v1870 = vpop.trf.xlu0
  %v1871 = vpop.trf.xlu0
  %v1872 = vpop.trf.xlu0
  %v1873 = vpop.trf.xlu0
  %v1874 = vpop.trf.xlu0
  %v1875 = vpop.trf.xlu0
  %v1876 = vpop.trf.xlu0
  %v1877 = vpop.trf.xlu0
  %v1878 = vpop.trf.xlu0
  %v1879 = vpop.trf.xlu0
  %v1880 = vpop.trf.xlu0
  %v1881 = vpop.trf.xlu0
  %1882 = vxpose.xlu0.b32.start [1/16] %v1846, 128
  %1883 = vxpose.xlu0.b32.cont [2/16] %v1847, 128
  %1884 = vxpose.xlu0.b32.cont [3/16] %v1848, 128
  %1885 = vxpose.xlu0.b32.cont [4/16] %v1849, 128
  %1886 = vxpose.xlu0.b32.cont [5/16] 0.0, 128
  %1887 = vxpose.xlu0.b32.cont [6/16] 0.0, 128
  %1888 = vxpose.xlu0.b32.cont [7/16] 0.0, 128
  %1889 = vxpose.xlu0.b32.cont [8/16] 0.0, 128
  %1890 = vxpose.xlu0.b32.cont [9/16] 0.0, 128
  %1891 = vxpose.xlu0.b32.cont [10/16] 0.0, 128
  %1892 = vxpose.xlu0.b32.cont [11/16] 0.0, 128
  %1893 = vxpose.xlu0.b32.cont [12/16] 0.0, 128
  %1894 = vxpose.xlu0.b32.cont [13/16] 0.0, 128
  %1895 = vxpose.xlu0.b32.cont [14/16] 0.0, 128
  %1896 = vxpose.xlu0.b32.cont [15/16] 0.0, 128
  %1897 = vxpose.xlu0.b32.end [16/16] 0.0, 128
  %v1898 = vpop.trf.xlu0
  %v1899 = vpop.trf.xlu0
  %v1900 = vpop.trf.xlu0
  %v1901 = vpop.trf.xlu0
  %v1902 = vpop.trf.xlu0
  %v1903 = vpop.trf.xlu0
  %v1904 = vpop.trf.xlu0
  %v1905 = vpop.trf.xlu0
  %v1906 = vpop.trf.xlu0
  %v1907 = vpop.trf.xlu0
  %v1908 = vpop.trf.xlu0
  %v1909 = vpop.trf.xlu0
  %v1910 = vpop.trf.xlu0
  %v1911 = vpop.trf.xlu0
  %v1912 = vpop.trf.xlu0
  %v1913 = vpop.trf.xlu0
  %v1914 = vadd.f32 %v1833, %v1866
  %v1915 = vadd.f32 %v1835, %v1867
  %v1916 = vadd.f32 %v1838, %v1898
  %v1917 = vadd.f32 %v1840, %v1899
  %1918 = vxpose.xlu0.b32.start [1/16] %v1914, 128
  %1919 = vxpose.xlu0.b32.cont [2/16] %v1915, 128
  %1920 = vxpose.xlu0.b32.cont [3/16] 0.0, 128
  %1921 = vxpose.xlu0.b32.cont [4/16] 0.0, 128
  %1922 = vxpose.xlu0.b32.cont [5/16] 0.0, 128
  %1923 = vxpose.xlu0.b32.cont [6/16] 0.0, 128
  %1924 = vxpose.xlu0.b32.cont [7/16] 0.0, 128
  %1925 = vxpose.xlu0.b32.cont [8/16] 0.0, 128
  %1926 = vxpose.xlu0.b32.cont [9/16] 0.0, 128
  %1927 = vxpose.xlu0.b32.cont [10/16] 0.0, 128
  %1928 = vxpose.xlu0.b32.cont [11/16] 0.0, 128
  %1929 = vxpose.xlu0.b32.cont [12/16] 0.0, 128
  %1930 = vxpose.xlu0.b32.cont [13/16] 0.0, 128
  %1931 = vxpose.xlu0.b32.cont [14/16] 0.0, 128
  %1932 = vxpose.xlu0.b32.cont [15/16] 0.0, 128
  %1933 = vxpose.xlu0.b32.end [16/16] 0.0, 128
  %v1934 = vpop.trf.xlu0
  %v1935 = vpop.trf.xlu0
  %v1936 = vpop.trf.xlu0
  %v1937 = vpop.trf.xlu0
  %v1938 = vpop.trf.xlu0
  %v1939 = vpop.trf.xlu0
  %v1940 = vpop.trf.xlu0
  %v1941 = vpop.trf.xlu0
  %v1942 = vpop.trf.xlu0
  %v1943 = vpop.trf.xlu0
  %v1944 = vpop.trf.xlu0
  %v1945 = vpop.trf.xlu0
  %v1946 = vpop.trf.xlu0
  %v1947 = vpop.trf.xlu0
  %v1948 = vpop.trf.xlu0
  %v1949 = vpop.trf.xlu0
  %1950 = vxpose.xlu0.b32.start [1/16] %v1916, 128
  %1951 = vxpose.xlu0.b32.cont [2/16] %v1917, 128
  %1952 = vxpose.xlu0.b32.cont [3/16] 0.0, 128
  %1953 = vxpose.xlu0.b32.cont [4/16] 0.0, 128
  %1954 = vxpose.xlu0.b32.cont [5/16] 0.0, 128
  %1955 = vxpose.xlu0.b32.cont [6/16] 0.0, 128
  %1956 = vxpose.xlu0.b32.cont [7/16] 0.0, 128
  %1957 = vxpose.xlu0.b32.cont [8/16] 0.0, 128
  %1958 = vxpose.xlu0.b32.cont [9/16] 0.0, 128
  %1959 = vxpose.xlu0.b32.cont [10/16] 0.0, 128
  %1960 = vxpose.xlu0.b32.cont [11/16] 0.0, 128
  %1961 = vxpose.xlu0.b32.cont [12/16] 0.0, 128
  %1962 = vxpose.xlu0.b32.cont [13/16] 0.0, 128
  %1963 = vxpose.xlu0.b32.cont [14/16] 0.0, 128
  %1964 = vxpose.xlu0.b32.cont [15/16] 0.0, 128
  %1965 = vxpose.xlu0.b32.end [16/16] 0.0, 128
  %v1966 = vpop.trf.xlu0
  %v1967 = vpop.trf.xlu0
  %v1968 = vpop.trf.xlu0
  %v1969 = vpop.trf.xlu0
  %v1970 = vpop.trf.xlu0
  %v1971 = vpop.trf.xlu0
  %v1972 = vpop.trf.xlu0
  %v1973 = vpop.trf.xlu0
  %v1974 = vpop.trf.xlu0
  %v1975 = vpop.trf.xlu0
  %v1976 = vpop.trf.xlu0
  %v1977 = vpop.trf.xlu0
  %v1978 = vpop.trf.xlu0
  %v1979 = vpop.trf.xlu0
  %v1980 = vpop.trf.xlu0
  %v1981 = vpop.trf.xlu0
  %1982 = vst.msk [vmem:[%s7] sm:$0xff] %vm35, %v1934
  %1983 = vst.msk [vmem:[%s7 + $0x8] sm:$0xff] %vm35, %v1935
  %1984 = vst.msk [vmem:[%s7 + $0x10] sm:$0xff] %vm35, %v1936
  %1985 = vst.msk [vmem:[%s7 + $0x18] sm:$0xff] %vm35, %v1937
  %1986 = vst.msk [vmem:[%s7 + $0x20] sm:$0xff] %vm35, %v1966
  %1987 = vst.msk [vmem:[%s7 + $0x28] sm:$0xff] %vm35, %v1967
  %1988 = vst.msk [vmem:[%s7 + $0x30] sm:$0xff] %vm35, %v1968
  %1989 = vst.msk [vmem:[%s7 + $0x38] sm:$0xff] %vm35, %v1969
  // Predicated region
  $region30: #{tpu_custom_call.1} parent=0 // pred_check
    _
  $region31: #{tpu_custom_call.1} parent=0 // pred_check_branch
    %1991 = sbr.rel (0) target = $region33
  $region32: #{tpu_custom_call.1} parent=0 // pred_region
    _
  $region33: #{tpu_custom_call.1} parent=0 // pred_fallthru
    _
  // Predicated region
  $region34: #{tpu_custom_call.1} parent=0 // pred_check
    _
  $region35: #{tpu_custom_call.1} parent=0 // pred_check_branch
    %1993 = sbr.rel (0) target = $region37
  $region36: #{tpu_custom_call.1} parent=0 // pred_region
    _
  $region37: #{tpu_custom_call.1} parent=0 // pred_fallthru
    _

</llo_original>
